<compile_context>
chip_gen: v7x
topology: tpu7x:2x2x1
jax: 0.10.0
libtpu: 0.0.40
codegen_flags: <defaults>
</compile_context>

<pallas_src>
import functools
import math

import jax
import jax.numpy as jnp
from jax.experimental import pallas as pl
from jax.experimental.pallas import tpu as pltpu

_NEG = -1e30  # bias padding: padded softmax / log-softmax columns contribute 0


def _round_up(x, m):
    return (x + m - 1) // m * m


def attn_decoder_kernel(tok_ref, hid0_ref, enc_c_ref,
                        w1_ref, b1_ref, w_ih_ref, b_ih_ref,
                        w_out_ref, b_out_ref,
                        logp_ref, attw_ref, hnew_ref):
    f32, bf16 = jnp.float32, jnp.bfloat16
    t = pl.program_id(0)

    # hidden state is carried across grid steps in the resident output block
    @pl.when(t == 0)
    def _():
        hnew_ref[...] = hid0_ref[...]

    hid = hnew_ref[...]                                   # (Bp, Hp) f32
    hid_b = hid.astype(bf16)
    Bp, Hp = hid.shape
    Vp = w_out_ref.shape[1]
    Lp = attw_ref.shape[2]

    # ---- pass 1: one wide MXU matmul on [one_hot(token) | hidden] ----------
    # W1 columns: [ attn scores (Lp) | emb@W_comb_e (Hp) | gh_r | gh_z | gh_n ]
    # (embedding table already folded into W1 rows [0:V] at pack time; dropout
    #  is identity in eval mode)
    tok = tok_ref[0]                                      # (Bp, 1) int32
    onehot = jnp.where(
        jax.lax.broadcasted_iota(jnp.int32, (Bp, Vp), 1) == tok, 1.0, 0.0
    ).astype(bf16)                                        # padded rows (tok=-1) -> 0
    lhs1 = jnp.concatenate([onehot, hid_b], axis=-1)      # (Bp, Vp+Hp)
    p1 = jnp.dot(lhs1, w1_ref[...], preferred_element_type=f32) + b1_ref[...]
    scores = p1[:, 0:Lp]                                  # + b_attn (-1e30 pad)
    x_e = p1[:, Lp:Lp + Hp]                               # emb@W_comb_e + b_comb
    gh = p1[:, Lp + Hp:]                                  # hid@W_hh (r|z|n) + b_hh

    # softmax over attention scores (padded cols biased to -1e30 -> 0 weight)
    m = jnp.max(scores, axis=-1, keepdims=True)
    e = jnp.exp(scores - m)
    attw = e * pl.reciprocal(jnp.sum(e, axis=-1, keepdims=True), approx=True)
    attw_ref[0] = attw

    # ---- pass 2: attention apply fused with attn_combine's context half ----
    # enc_c = encoder_outputs @ W_comb_c was folded once per sequence.
    x_c = jnp.dot(attw.astype(bf16), enc_c_ref[...], preferred_element_type=f32)
    x = jnp.maximum(x_e + x_c, 0.0)                       # relu(attn_combine(...))

    # ---- pass 3: GRU input-side gates, then the cell update -----------------
    gi = jnp.dot(x.astype(bf16), w_ih_ref[...],
                 preferred_element_type=f32) + b_ih_ref[...]      # (Bp, 3Hp)
    r = jax.nn.sigmoid(gi[:, 0:Hp] + gh[:, 0:Hp])
    z = jax.nn.sigmoid(gi[:, Hp:2 * Hp] + gh[:, Hp:2 * Hp])
    n = jnp.tanh(gi[:, 2 * Hp:3 * Hp] + r * gh[:, 2 * Hp:3 * Hp])  # b_hn inside r*()
    hnew = (1.0 - z) * n + z * hid                        # blend with f32 hidden
    hnew_ref[...] = hnew

    # ---- pass 4: output projection + log-softmax ----------------------------
    logits = jnp.dot(hnew.astype(bf16), w_out_ref[...],
                     preferred_element_type=f32) + b_out_ref[...]
    lm = jnp.max(logits, axis=-1, keepdims=True)
    lse = jnp.log(jnp.sum(jnp.exp(logits - lm), axis=-1, keepdims=True)) + lm
    logp_ref[0] = logits - lse


def pack_params(p):
    """Pad/fuse PyTorch-shaped params into lane-dense bf16 kernel weights."""
    f32, bf16 = jnp.float32, jnp.bfloat16
    H, L = p['w_attn_e'].shape
    V = p['w_out'].shape[1]
    Hp, Lp, Vp = _round_up(H, 128), _round_up(L, 128), _round_up(V, 128)
    emb = p['embedding']                                  # (V, H)

    # pass-1 fused weight: rows = [one_hot block (Vp) | hidden block (Hp)]
    # cols = [ attn (Lp) | emb@W_comb_e (Hp) | gh_r (Hp) | gh_z (Hp) | gh_n (Hp) ]
    N1 = Lp + 4 * Hp
    w1 = jnp.zeros((Vp + Hp, N1), f32)
    w1 = w1.at[:V, :L].set(emb @ p['w_attn_e'])                     # fold emb table
    w1 = w1.at[:V, Lp:Lp + H].set(emb @ p['w_comb_e'])              # fold emb table
    w1 = w1.at[Vp:Vp + H, :L].set(p['w_attn_h'])
    w1 = w1.at[Vp:Vp + H, Lp + Hp:Lp + Hp + H].set(p['w_hh'][:, 0:H])          # r
    w1 = w1.at[Vp:Vp + H, Lp + 2 * Hp:Lp + 2 * Hp + H].set(p['w_hh'][:, H:2 * H])  # z
    w1 = w1.at[Vp:Vp + H, Lp + 3 * Hp:Lp + 3 * Hp + H].set(p['w_hh'][:, 2 * H:])   # n

    b1 = jnp.zeros((1, N1), f32)
    b1 = b1.at[:, L:Lp].set(_NEG)                          # keep f32! (softmax pad)
    b1 = b1.at[:, :L].set(p['b_attn'])
    b1 = b1.at[:, Lp:Lp + H].set(p['b_comb'])
    b1 = b1.at[:, Lp + Hp:Lp + Hp + H].set(p['b_hh'][:, 0:H])
    b1 = b1.at[:, Lp + 2 * Hp:Lp + 2 * Hp + H].set(p['b_hh'][:, H:2 * H])
    b1 = b1.at[:, Lp + 3 * Hp:Lp + 3 * Hp + H].set(p['b_hh'][:, 2 * H:])

    # GRU input-side gates (pass 3), gate blocks at 128-lane aligned offsets
    w_ih = jnp.zeros((Hp, 3 * Hp), f32)
    w_ih = w_ih.at[:H, 0:H].set(p['w_ih'][:, 0:H])
    w_ih = w_ih.at[:H, Hp:Hp + H].set(p['w_ih'][:, H:2 * H])
    w_ih = w_ih.at[:H, 2 * Hp:2 * Hp + H].set(p['w_ih'][:, 2 * H:])
    b_ih = jnp.zeros((1, 3 * Hp), f32)
    b_ih = b_ih.at[:, 0:H].set(p['b_ih'][:, 0:H])
    b_ih = b_ih.at[:, Hp:Hp + H].set(p['b_ih'][:, H:2 * H])
    b_ih = b_ih.at[:, 2 * Hp:2 * Hp + H].set(p['b_ih'][:, 2 * H:])

    # output projection (pass 4)
    w_out = jnp.zeros((Hp, Vp), f32).at[:H, :V].set(p['w_out'])
    b_out = jnp.full((1, Vp), _NEG, f32).at[:, :V].set(p['b_out'])   # keep f32!

    return {
        'w1': w1.astype(bf16), 'b1': b1,
        'w_ih': w_ih.astype(bf16), 'b_ih': b_ih,
        'w_out': w_out.astype(bf16), 'b_out': b_out,
        'w_comb_c': p['w_comb_c'],   # folded into encoder_outputs once per sequence
        'V': V,
    }


@functools.partial(jax.jit, static_argnames=("V",))
def _decode_impl(token_seq, hidden, encoder_outputs,
                 w_comb_c, w1, b1, w_ih, b_ih, w_out, b_out, *, V):
    """Teacher-forced T-step decode in one pallas_call (weights VMEM-resident)."""
    T, B = token_seq.shape
    H = hidden.shape[-1]
    L = encoder_outputs.shape[0]
    Hp, Vp = w_out.shape
    N1 = w1.shape[1]
    Lp = N1 - 4 * Hp
    Bp = _round_up(max(B, 8), 8)   # for serving, batch streams so Bp >= 128

    # per-sequence encoder prep (hoisted out of the per-step path): fold the
    # context half of attn_combine so pass 2 is a single matmul.
    enc_c = jnp.zeros((Lp, Hp), jnp.float32).at[:L, :H].set(
        encoder_outputs.astype(jnp.float32) @ w_comb_c).astype(jnp.bfloat16)

    tok_p = jnp.full((T, Bp, 1), -1, jnp.int32).at[:, :B, 0].set(token_seq)
    hid_p = jnp.zeros((Bp, Hp), jnp.float32).at[:B, :H].set(hidden[0])

    const = lambda t: (0, 0)       # weights / encoder / initial hidden: fetch once
    step3 = lambda t: (t, 0, 0)    # per-step tokens and outputs

    operands = (tok_p, hid_p, enc_c, w1, b1, w_ih, b_ih, w_out, b_out)
    in_specs = [
        pl.BlockSpec((1, Bp, 1), step3),
        pl.BlockSpec((Bp, Hp), const),
        pl.BlockSpec((Lp, Hp), const),
        pl.BlockSpec(w1.shape, const),
        pl.BlockSpec(b1.shape, const),
        pl.BlockSpec(w_ih.shape, const),
        pl.BlockSpec(b_ih.shape, const),
        pl.BlockSpec(w_out.shape, const),
        pl.BlockSpec(b_out.shape, const),
    ]
    out_shape = (
        jax.ShapeDtypeStruct((T, Bp, Vp), jnp.float32),   # log-probs (padded)
        jax.ShapeDtypeStruct((T, Bp, Lp), jnp.float32),   # attention weights (padded)
        jax.ShapeDtypeStruct((Bp, Hp), jnp.float32),      # final hidden (padded)
    )
    out_specs = (
        pl.BlockSpec((1, Bp, Vp), step3),
        pl.BlockSpec((1, Bp, Lp), step3),
        pl.BlockSpec((Bp, Hp), const),                    # resident hidden carry
    )

    flops = 2 * T * Bp * ((Vp + Hp) * N1 + Lp * Hp + Hp * 3 * Hp + Hp * Vp)
    transcendentals = T * Bp * (Lp + Vp + 3 * Hp)
    bytes_accessed = (sum(math.prod(a.shape) * a.dtype.itemsize for a in operands)
                      + sum(math.prod(s.shape) * 4 for s in out_shape))

    logp, attw, hnew = pl.pallas_call(
        attn_decoder_kernel,
        grid=(T,),
        in_specs=in_specs,
        out_specs=out_specs,
        out_shape=out_shape,
        compiler_params=pltpu.CompilerParams(
            dimension_semantics=("arbitrary",),           # recurrence over timesteps
            vmem_limit_bytes=8 * 1024 * 1024),
        cost_estimate=pl.CostEstimate(flops=flops,
                                      transcendentals=transcendentals,
                                      bytes_accessed=bytes_accessed),
    )(*operands)

    return logp[:, :B, :V], hnew[:B, :H][None], attw[:, :B, :L]


def attn_decoder_decode(token_seq, hidden, encoder_outputs, packed):
    """token_seq: (T, B) int32; hidden: (1, B, H); encoder_outputs: (L, H)."""
    return _decode_impl(token_seq, hidden, encoder_outputs,
                        packed['w_comb_c'], packed['w1'], packed['b1'],
                        packed['w_ih'], packed['b_ih'],
                        packed['w_out'], packed['b_out'], V=packed['V'])


def attn_decoder_forward(tokens, hidden, encoder_outputs, packed):
    """Single step == AttnDecoderRNN.forward (eval mode). tokens: (B,) int32."""
    logp, hnew, attw = attn_decoder_decode(tokens[None], hidden, encoder_outputs, packed)
    return logp[0], hnew, attw[0]


def init_params(key, hidden_size, output_size, max_length):
    """Deterministic synthetic parameters with the shapes AttnDecoderRNN implies."""
    H, V, L = hidden_size, output_size, max_length
    ks = jax.random.split(key, 13)

    def u(k, shape, fan_in):
        b = 1.0 / jnp.sqrt(jnp.float32(fan_in))
        return jax.random.uniform(k, shape, jnp.float32, -b, b)

    return {
        'embedding': jax.random.normal(ks[0], (V, H), jnp.float32),       # Embedding(V,H)
        'w_attn_e': u(ks[1], (H, L), 2 * H),                              # Linear(2H,L)
        'w_attn_h': u(ks[2], (H, L), 2 * H),
        'b_attn':   u(ks[3], (1, L), 2 * H),
        'w_comb_e': u(ks[4], (H, H), 2 * H),                              # Linear(2H,H)
        'w_comb_c': u(ks[5], (H, H), 2 * H),
        'b_comb':   u(ks[6], (1, H), 2 * H),
        'w_ih': u(ks[7], (H, 3 * H), H),                                  # GRU(H,H), gates r|z|n
        'b_ih': u(ks[8], (1, 3 * H), H),
        'w_hh': u(ks[9], (H, 3 * H), H),
        'b_hh': u(ks[10], (1, 3 * H), H),
        'w_out': u(ks[11], (H, V), H),                                    # Linear(H,V)
        'b_out': u(ks[12], (1, V), H),
    }


def reference_forward(tokens, hidden, enc, p):
    """Pure-JAX f32 reference mirroring the PyTorch forward (eval mode)."""
    emb = jnp.take(p['embedding'], tokens, axis=0)
    hid = hidden[0]
    H = hid.shape[-1]
    attw = jax.nn.softmax(emb @ p['w_attn_e'] + hid @ p['w_attn_h'] + p['b_attn'], axis=1)
    ctx = attw @ enc
    x = jax.nn.relu(emb @ p['w_comb_e'] + ctx @ p['w_comb_c'] + p['b_comb'])
    gi = x @ p['w_ih'] + p['b_ih']
    gh = hid @ p['w_hh'] + p['b_hh']
    r = jax.nn.sigmoid(gi[:, :H] + gh[:, :H])
    z = jax.nn.sigmoid(gi[:, H:2 * H] + gh[:, H:2 * H])
    n = jnp.tanh(gi[:, 2 * H:] + r * gh[:, 2 * H:])
    hnew = (1.0 - z) * n + z * hid
    logits = hnew @ p['w_out'] + p['b_out']
    return jax.nn.log_softmax(logits, axis=1), hnew[None], attw


if __name__ == "__main__":
    B, H, V, L = 2, 32, 64, 10   # batch, hidden_size, output_size, max_length
    T = 5                        # timesteps for the fused multi-step decode test

    key = jax.random.PRNGKey(0)
    k_tok, k_seq, k_enc, k_par, k_hid = jax.random.split(key, 5)

    params = init_params(k_par, H, V, L)
    packed = pack_params(params)

    tokens = jax.random.randint(k_tok, (B,), 0, V, dtype=jnp.int32)
    hidden = jnp.zeros((1, B, H), jnp.float32)                     # initHidden()
    encoder_outputs = jax.random.normal(k_enc, (L, H), jnp.float32)

    # --- single step: matches AttnDecoderRNN.forward ------------------------
    logp, hnew, attw = attn_decoder_forward(tokens, hidden, encoder_outputs, packed)
    jax.block_until_ready((logp, hnew, attw))
    r_logp, r_hnew, r_attw = reference_forward(tokens, hidden, encoder_outputs, params)
    assert logp.shape == (B, V) and hnew.shape == (1, B, H) and attw.shape == (B, L)
    # tolerance loosened: bf16 MXU (f32 accumulation) + approx EUP reciprocal
    assert jnp.allclose(logp, r_logp, atol=5e-2, rtol=5e-2)
    assert jnp.allclose(hnew, r_hnew, atol=5e-2, rtol=5e-2)
    assert jnp.allclose(attw, r_attw, atol=5e-2, rtol=5e-2)

    # --- multi-step teacher-forced decode: one pallas_call, T grid steps ----
    token_seq = jax.random.randint(k_seq, (T, B), 0, V, dtype=jnp.int32)
    hidden0 = jax.random.normal(k_hid, (1, B, H), jnp.float32) * 0.1
    s_logp, s_hid, s_attw = attn_decoder_decode(token_seq, hidden0, encoder_outputs, packed)
    jax.block_until_ready((s_logp, s_hid, s_attw))

    r_hid = hidden0
    for t in range(T):
        rl, r_hid, ra = reference_forward(token_seq[t], r_hid, encoder_outputs, params)
        assert jnp.allclose(s_logp[t], rl, atol=6e-2, rtol=6e-2)
        assert jnp.allclose(s_attw[t], ra, atol=6e-2, rtol=6e-2)
    assert jnp.allclose(s_hid, r_hid, atol=6e-2, rtol=6e-2)
    assert s_logp.shape == (T, B, V) and s_attw.shape == (T, B, L)

    print("KERNEL_OK")
</pallas_src>

<mosaic_0001>
module attributes {stable_mosaic.version = 11 : i64} {
  func.func @attn_decoder_kernel(%arg0: i32, %arg1: memref<1x8x1xi32, #tpu.memory_space<vmem>>, %arg2: memref<8x128xf32, #tpu.memory_space<vmem>>, %arg3: memref<128x128xbf16, #tpu.memory_space<vmem>>, %arg4: memref<256x640xbf16, #tpu.memory_space<vmem>>, %arg5: memref<1x640xf32, #tpu.memory_space<vmem>>, %arg6: memref<128x384xbf16, #tpu.memory_space<vmem>>, %arg7: memref<1x384xf32, #tpu.memory_space<vmem>>, %arg8: memref<128x128xbf16, #tpu.memory_space<vmem>>, %arg9: memref<1x128xf32, #tpu.memory_space<vmem>>, %arg10: memref<1x8x128xf32, #tpu.memory_space<vmem>>, %arg11: memref<1x8x128xf32, #tpu.memory_space<vmem>>, %arg12: memref<8x128xf32, #tpu.memory_space<vmem>>) attributes {dimension_semantics = [#tpu.dimension_semantics<arbitrary>], iteration_bounds = array<i64: 1>, scalar_prefetch = 0 : i64, scratch_operands = 0 : i64, tpu.core_type = #tpu.core_type<tc>, window_params = [{transform_indices = @transform_0, window_bounds = array<i64: 1, 8, 1>}, {pipeline_mode = #tpu.pipeline_mode<synchronous>, transform_indices = @transform_1, window_bounds = array<i64: 8, 128>}, {pipeline_mode = #tpu.pipeline_mode<synchronous>, transform_indices = @transform_2, window_bounds = array<i64: 128, 128>}, {pipeline_mode = #tpu.pipeline_mode<synchronous>, transform_indices = @transform_3, window_bounds = array<i64: 256, 640>}, {pipeline_mode = #tpu.pipeline_mode<synchronous>, transform_indices = @transform_4, window_bounds = array<i64: 1, 640>}, {pipeline_mode = #tpu.pipeline_mode<synchronous>, transform_indices = @transform_5, window_bounds = array<i64: 128, 384>}, {pipeline_mode = #tpu.pipeline_mode<synchronous>, transform_indices = @transform_6, window_bounds = array<i64: 1, 384>}, {pipeline_mode = #tpu.pipeline_mode<synchronous>, transform_indices = @transform_7, window_bounds = array<i64: 128, 128>}, {pipeline_mode = #tpu.pipeline_mode<synchronous>, transform_indices = @transform_8, window_bounds = array<i64: 1, 128>}, {transform_indices = @transform_9, window_bounds = array<i64: 1, 8, 128>}, {transform_indices = @transform_10, window_bounds = array<i64: 1, 8, 128>}, {pipeline_mode = #tpu.pipeline_mode<synchronous>, transform_indices = @transform_11, window_bounds = array<i64: 8, 128>}]} {
    %c0_i32 = arith.constant 0 : i32
    %0 = arith.cmpi eq, %arg0, %c0_i32 : i32
    %1 = arith.extui %0 : i1 to i32
    %c0_i32_0 = arith.constant 0 : i32
    %2 = arith.cmpi ne, %1, %c0_i32_0 : i32
    scf.if %2 {
      %c0_40 = arith.constant 0 : index
      %c0_41 = arith.constant 0 : index
      %95 = vector.load %arg2[%c0_40, %c0_41] : memref<8x128xf32, #tpu.memory_space<vmem>>, vector<8x128xf32>
      %c0_42 = arith.constant 0 : index
      %c0_43 = arith.constant 0 : index
      %96 = vector.load %arg12[%c0_42, %c0_43] : memref<8x128xf32, #tpu.memory_space<vmem>>, vector<8x128xf32>
      tpu.vector_store %arg12[%c0_42, %c0_43], %95 {strides = array<i32>} : memref<8x128xf32, #tpu.memory_space<vmem>>, vector<8x128xf32>,
    } else {
    }
    %c0 = arith.constant 0 : index
    %c0_1 = arith.constant 0 : index
    %3 = vector.load %arg12[%c0, %c0_1] : memref<8x128xf32, #tpu.memory_space<vmem>>, vector<8x128xf32>
    %4 = arith.truncf %3 : vector<8x128xf32> to vector<8x128xbf16>
    %c0_2 = arith.constant 0 : index
    %c0_3 = arith.constant 0 : index
    %c0_4 = arith.constant 0 : index
    %5 = vector.load %arg1[%c0_2, %c0_3, %c0_4] : memref<1x8x1xi32, #tpu.memory_space<vmem>>, vector<1x8x1xi32>
    %6 = vector.shape_cast %5 : vector<1x8x1xi32> to vector<8x1xi32>
    %7 = tpu.iota {dimensions = array<i32: 1>} : vector<8x128xi32>
    %8 = vector.broadcast %6 : vector<8x1xi32> to vector<8x128xi32>
    %9 = arith.cmpi eq, %7, %8 : vector<8x128xi32>
    %cst = arith.constant 1.000000e+00 : f32
    %cst_5 = arith.constant 0.000000e+00 : f32
    %10 = vector.broadcast %cst : f32 to vector<8x128xf32>
    %11 = vector.broadcast %cst_5 : f32 to vector<8x128xf32>
    %12 = arith.select %9, %10, %11 : vector<8x128xi1>, vector<8x128xf32>
    %13 = arith.truncf %12 : vector<8x128xf32> to vector<8x128xbf16>
    %14 = tpu.concatenate %13, %4 in 1 : vector<8x128xbf16>, vector<8x128xbf16> -> vector<8x256xbf16>
    %c0_6 = arith.constant 0 : index
    %c0_7 = arith.constant 0 : index
    %15 = vector.load %arg4[%c0_6, %c0_7] : memref<256x640xbf16, #tpu.memory_space<vmem>>, vector<256x640xbf16>
    %cst_8 = arith.constant dense<0.000000e+00> : vector<8x640xf32>
    %16 = tpu.matmul %14, %15, %cst_8 {dimension_numbers = #tpu.dot_dimension_numbers<[1], [0], [0], [1], [0, 0, 1, 1], [], []>} : vector<8x256xbf16>, vector<256x640xbf16>, vector<8x640xf32> -> vector<8x640xf32>
    %c0_9 = arith.constant 0 : index
    %c0_10 = arith.constant 0 : index
    %17 = vector.load %arg5[%c0_9, %c0_10] : memref<1x640xf32, #tpu.memory_space<vmem>>, vector<1x640xf32>
    %18 = vector.broadcast %17 : vector<1x640xf32> to vector<8x640xf32>
    %19 = arith.addf %16, %18 : vector<8x640xf32>
    %20 = vector.extract_strided_slice %19 {offsets = [0, 0], sizes = [8, 128], strides = [1, 1]} : vector<8x640xf32> to vector<8x128xf32>
    %21 = vector.extract_strided_slice %19 {offsets = [0, 128], sizes = [8, 128], strides = [1, 1]} : vector<8x640xf32> to vector<8x128xf32>
    %22 = vector.extract_strided_slice %19 {offsets = [0, 256], sizes = [8, 384], strides = [1, 1]} : vector<8x640xf32> to vector<8x384xf32>
    %cst_11 = arith.constant dense<0xFF800000> : vector<8xf32>
    %23 = vector.multi_reduction <maximumf>, %20, %cst_11 [1] : vector<8x128xf32> to vector<8xf32>
    %24 = vector.shape_cast %23 : vector<8xf32> to vector<8x1xf32>
    %25 = vector.broadcast %24 : vector<8x1xf32> to vector<8x128xf32>
    %26 = arith.subf %20, %25 : vector<8x128xf32>
    %27 = math.exp %26 : vector<8x128xf32>
    %cst_12 = arith.constant dense<0.000000e+00> : vector<8xf32>
    %28 = vector.multi_reduction <add>, %27, %cst_12 [1] : vector<8x128xf32> to vector<8xf32>
    %29 = vector.shape_cast %28 : vector<8xf32> to vector<8x1xf32>
    %30 = tpu.reciprocal %29 {approx = true} : vector<8x1xf32> -> vector<8x1xf32>
    %31 = vector.broadcast %30 : vector<8x1xf32> to vector<8x128xf32>
    %32 = arith.mulf %27, %31 : vector<8x128xf32>
    %c0_13 = arith.constant 0 : index
    %c0_14 = arith.constant 0 : index
    %c0_15 = arith.constant 0 : index
    %33 = vector.load %arg11[%c0_13, %c0_14, %c0_15] : memref<1x8x128xf32, #tpu.memory_space<vmem>>, vector<1x8x128xf32>
    %34 = vector.shape_cast %33 : vector<1x8x128xf32> to vector<8x128xf32>
    %35 = vector.shape_cast %32 : vector<8x128xf32> to vector<1x8x128xf32>
    tpu.vector_store %arg11[%c0_13, %c0_14, %c0_15], %35 {strides = array<i32>} : memref<1x8x128xf32, #tpu.memory_space<vmem>>, vector<1x8x128xf32>,
    %36 = arith.truncf %32 : vector<8x128xf32> to vector<8x128xbf16>
    %c0_16 = arith.constant 0 : index
    %c0_17 = arith.constant 0 : index
    %37 = vector.load %arg3[%c0_16, %c0_17] : memref<128x128xbf16, #tpu.memory_space<vmem>>, vector<128x128xbf16>
    %cst_18 = arith.constant dense<0.000000e+00> : vector<8x128xf32>
    %38 = tpu.matmul %36, %37, %cst_18 {dimension_numbers = #tpu.dot_dimension_numbers<[1], [0], [0], [1], [0, 0, 1, 1], [], []>} : vector<8x128xbf16>, vector<128x128xbf16>, vector<8x128xf32> -> vector<8x128xf32>
    %39 = arith.addf %21, %38 : vector<8x128xf32>
    %cst_19 = arith.constant 0.000000e+00 : f32
    %40 = vector.broadcast %cst_19 : f32 to vector<8x128xf32>
    %41 = arith.maximumf %39, %40 : vector<8x128xf32>
    %42 = arith.truncf %41 : vector<8x128xf32> to vector<8x128xbf16>
    %c0_20 = arith.constant 0 : index
    %c0_21 = arith.constant 0 : index
    %43 = vector.load %arg6[%c0_20, %c0_21] : memref<128x384xbf16, #tpu.memory_space<vmem>>, vector<128x384xbf16>
    %cst_22 = arith.constant dense<0.000000e+00> : vector<8x384xf32>
    %44 = tpu.matmul %42, %43, %cst_22 {dimension_numbers = #tpu.dot_dimension_numbers<[1], [0], [0], [1], [0, 0, 1, 1], [], []>} : vector<8x128xbf16>, vector<128x384xbf16>, vector<8x384xf32> -> vector<8x384xf32>
    %c0_23 = arith.constant 0 : index
    %c0_24 = arith.constant 0 : index
    %45 = vector.load %arg7[%c0_23, %c0_24] : memref<1x384xf32, #tpu.memory_space<vmem>>, vector<1x384xf32>
    %46 = vector.broadcast %45 : vector<1x384xf32> to vector<8x384xf32>
    %47 = arith.addf %44, %46 : vector<8x384xf32>
    %48 = vector.extract_strided_slice %47 {offsets = [0, 0], sizes = [8, 128], strides = [1, 1]} : vector<8x384xf32> to vector<8x128xf32>
    %49 = vector.extract_strided_slice %22 {offsets = [0, 0], sizes = [8, 128], strides = [1, 1]} : vector<8x384xf32> to vector<8x128xf32>
    %50 = arith.addf %48, %49 : vector<8x128xf32>
    %51 = arith.negf %50 : vector<8x128xf32>
    %52 = math.exp %51 : vector<8x128xf32>
    %cst_25 = arith.constant 1.000000e+00 : f32
    %53 = vector.broadcast %cst_25 : f32 to vector<8x128xf32>
    %54 = arith.addf %53, %52 : vector<8x128xf32>
    %55 = arith.divf %53, %54 : vector<8x128xf32>
    %56 = vector.extract_strided_slice %47 {offsets = [0, 128], sizes = [8, 128], strides = [1, 1]} : vector<8x384xf32> to vector<8x128xf32>
    %57 = vector.extract_strided_slice %22 {offsets = [0, 128], sizes = [8, 128], strides = [1, 1]} : vector<8x384xf32> to vector<8x128xf32>
    %58 = arith.addf %56, %57 : vector<8x128xf32>
    %59 = arith.negf %58 : vector<8x128xf32>
    %60 = math.exp %59 : vector<8x128xf32>
    %cst_26 = arith.constant 1.000000e+00 : f32
    %61 = vector.broadcast %cst_26 : f32 to vector<8x128xf32>
    %62 = arith.addf %61, %60 : vector<8x128xf32>
    %63 = arith.divf %61, %62 : vector<8x128xf32>
    %64 = vector.extract_strided_slice %47 {offsets = [0, 256], sizes = [8, 128], strides = [1, 1]} : vector<8x384xf32> to vector<8x128xf32>
    %65 = vector.extract_strided_slice %22 {offsets = [0, 256], sizes = [8, 128], strides = [1, 1]} : vector<8x384xf32> to vector<8x128xf32>
    %66 = arith.mulf %55, %65 : vector<8x128xf32>
    %67 = arith.addf %64, %66 : vector<8x128xf32>
    %68 = math.tanh %67 : vector<8x128xf32>
    %cst_27 = arith.constant 1.000000e+00 : f32
    %69 = vector.broadcast %cst_27 : f32 to vector<8x128xf32>
    %70 = arith.subf %69, %63 : vector<8x128xf32>
    %71 = arith.mulf %70, %68 : vector<8x128xf32>
    %72 = arith.mulf %63, %3 : vector<8x128xf32>
    %73 = arith.addf %71, %72 : vector<8x128xf32>
    %c0_28 = arith.constant 0 : index
    %c0_29 = arith.constant 0 : index
    %74 = vector.load %arg12[%c0_28, %c0_29] : memref<8x128xf32, #tpu.memory_space<vmem>>, vector<8x128xf32>
    tpu.vector_store %arg12[%c0_28, %c0_29], %73 {strides = array<i32>} : memref<8x128xf32, #tpu.memory_space<vmem>>, vector<8x128xf32>,
    %75 = arith.truncf %73 : vector<8x128xf32> to vector<8x128xbf16>
    %c0_30 = arith.constant 0 : index
    %c0_31 = arith.constant 0 : index
    %76 = vector.load %arg8[%c0_30, %c0_31] : memref<128x128xbf16, #tpu.memory_space<vmem>>, vector<128x128xbf16>
    %cst_32 = arith.constant dense<0.000000e+00> : vector<8x128xf32>
    %77 = tpu.matmul %75, %76, %cst_32 {dimension_numbers = #tpu.dot_dimension_numbers<[1], [0], [0], [1], [0, 0, 1, 1], [], []>} : vector<8x128xbf16>, vector<128x128xbf16>, vector<8x128xf32> -> vector<8x128xf32>
    %c0_33 = arith.constant 0 : index
    %c0_34 = arith.constant 0 : index
    %78 = vector.load %arg9[%c0_33, %c0_34] : memref<1x128xf32, #tpu.memory_space<vmem>>, vector<1x128xf32>
    %79 = vector.broadcast %78 : vector<1x128xf32> to vector<8x128xf32>
    %80 = arith.addf %77, %79 : vector<8x128xf32>
    %cst_35 = arith.constant dense<0xFF800000> : vector<8xf32>
    %81 = vector.multi_reduction <maximumf>, %80, %cst_35 [1] : vector<8x128xf32> to vector<8xf32>
    %82 = vector.shape_cast %81 : vector<8xf32> to vector<8x1xf32>
    %83 = vector.broadcast %82 : vector<8x1xf32> to vector<8x128xf32>
    %84 = arith.subf %80, %83 : vector<8x128xf32>
    %85 = math.exp %84 : vector<8x128xf32>
    %cst_36 = arith.constant dense<0.000000e+00> : vector<8xf32>
    %86 = vector.multi_reduction <add>, %85, %cst_36 [1] : vector<8x128xf32> to vector<8xf32>
    %87 = vector.shape_cast %86 : vector<8xf32> to vector<8x1xf32>
    %88 = math.log %87 : vector<8x1xf32>
    %89 = arith.addf %88, %82 : vector<8x1xf32>
    %90 = vector.broadcast %89 : vector<8x1xf32> to vector<8x128xf32>
    %91 = arith.subf %80, %90 : vector<8x128xf32>
    %c0_37 = arith.constant 0 : index
    %c0_38 = arith.constant 0 : index
    %c0_39 = arith.constant 0 : index
    %92 = vector.load %arg10[%c0_37, %c0_38, %c0_39] : memref<1x8x128xf32, #tpu.memory_space<vmem>>, vector<1x8x128xf32>
    %93 = vector.shape_cast %92 : vector<1x8x128xf32> to vector<8x128xf32>
    %94 = vector.shape_cast %91 : vector<8x128xf32> to vector<1x8x128xf32>
    tpu.vector_store %arg10[%c0_37, %c0_38, %c0_39], %94 {strides = array<i32>} : memref<1x8x128xf32, #tpu.memory_space<vmem>>, vector<1x8x128xf32>,
    return
  }
  func.func @transform_0(%arg0: i32) -> (i32, i32, i32) {
    %c0_i32 = arith.constant 0 : i32
    %c0_i32_0 = arith.constant 0 : i32
    %c0_i32_1 = arith.constant 0 : i32
    return %arg0, %c0_i32, %c0_i32_0 : i32, i32, i32
  }
  func.func @transform_1(%arg0: i32) -> (i32, i32) {
    %c0_i32 = arith.constant 0 : i32
    %c0_i32_0 = arith.constant 0 : i32
    %c0_i32_1 = arith.constant 0 : i32
    return %c0_i32, %c0_i32_0 : i32, i32
  }
  func.func @transform_2(%arg0: i32) -> (i32, i32) {
    %c0_i32 = arith.constant 0 : i32
    %c0_i32_0 = arith.constant 0 : i32
    %c0_i32_1 = arith.constant 0 : i32
    return %c0_i32, %c0_i32_0 : i32, i32
  }
  func.func @transform_3(%arg0: i32) -> (i32, i32) {
    %c0_i32 = arith.constant 0 : i32
    %c0_i32_0 = arith.constant 0 : i32
    %c0_i32_1 = arith.constant 0 : i32
    return %c0_i32, %c0_i32_0 : i32, i32
  }
  func.func @transform_4(%arg0: i32) -> (i32, i32) {
    %c0_i32 = arith.constant 0 : i32
    %c0_i32_0 = arith.constant 0 : i32
    %c0_i32_1 = arith.constant 0 : i32
    return %c0_i32, %c0_i32_0 : i32, i32
  }
  func.func @transform_5(%arg0: i32) -> (i32, i32) {
    %c0_i32 = arith.constant 0 : i32
    %c0_i32_0 = arith.constant 0 : i32
    %c0_i32_1 = arith.constant 0 : i32
    return %c0_i32, %c0_i32_0 : i32, i32
  }
  func.func @transform_6(%arg0: i32) -> (i32, i32) {
    %c0_i32 = arith.constant 0 : i32
    %c0_i32_0 = arith.constant 0 : i32
    %c0_i32_1 = arith.constant 0 : i32
    return %c0_i32, %c0_i32_0 : i32, i32
  }
  func.func @transform_7(%arg0: i32) -> (i32, i32) {
    %c0_i32 = arith.constant 0 : i32
    %c0_i32_0 = arith.constant 0 : i32
    %c0_i32_1 = arith.constant 0 : i32
    return %c0_i32, %c0_i32_0 : i32, i32
  }
  func.func @transform_8(%arg0: i32) -> (i32, i32) {
    %c0_i32 = arith.constant 0 : i32
    %c0_i32_0 = arith.constant 0 : i32
    %c0_i32_1 = arith.constant 0 : i32
    return %c0_i32, %c0_i32_0 : i32, i32
  }
  func.func @transform_9(%arg0: i32) -> (i32, i32, i32) {
    %c0_i32 = arith.constant 0 : i32
    %c0_i32_0 = arith.constant 0 : i32
    %c0_i32_1 = arith.constant 0 : i32
    return %arg0, %c0_i32, %c0_i32_0 : i32, i32, i32
  }
  func.func @transform_10(%arg0: i32) -> (i32, i32, i32) {
    %c0_i32 = arith.constant 0 : i32
    %c0_i32_0 = arith.constant 0 : i32
    %c0_i32_1 = arith.constant 0 : i32
    return %arg0, %c0_i32, %c0_i32_0 : i32, i32, i32
  }
  func.func @transform_11(%arg0: i32) -> (i32, i32) {
    %c0_i32 = arith.constant 0 : i32
    %c0_i32_0 = arith.constant 0 : i32
    %c0_i32_1 = arith.constant 0 : i32
    return %c0_i32, %c0_i32_0 : i32, i32
  }
}

</mosaic_0001>

<llo_original>
// kernel: _decode_impl.1
$region0: #{_decode_impl.1}
  #allocation0 [shape = 'u32[]', space=smem, size = 0x4, offset = 0x4, fixed_abs, tag = 'smem constant byte address 0x4 - core index']
  #allocation1 [shape = 'u32[144,128]{1,0:T(1,128)}', space=vmem, size = 0x12000, scoped, tag = 'internal scratch']
  %s0 = inlined_call_operand.vmem [shape: s32[1,8,1], index: 0, kind: input, shape index: {}]
  %s1 = inlined_call_operand.vmem [shape: f32[8,128], index: 1, kind: input, shape index: {}]
  %s2 = inlined_call_operand.vmem [shape: bf16[128,128], index: 2, kind: input, shape index: {}]
  %s3 = inlined_call_operand.hbm [shape: bf16[256,640], index: 3, kind: input, shape index: {}]
  %s4 = inlined_call_operand.vmem [shape: f32[1,640], index: 4, kind: input, shape index: {}]
  %s5 = inlined_call_operand.hbm [shape: bf16[128,384], index: 5, kind: input, shape index: {}]
  %s6 = inlined_call_operand.vmem [shape: f32[1,384], index: 6, kind: input, shape index: {}]
  %s7 = inlined_call_operand.vmem [shape: bf16[128,128], index: 7, kind: input, shape index: {}]
  %s8 = inlined_call_operand.vmem [shape: f32[1,128], index: 8, kind: input, shape index: {}]
  %s9 = inlined_call_operand.vmem [shape: f32[1,8,128], index: 9, kind: output, shape index: {0}]
  %s10 = inlined_call_operand.vmem [shape: f32[1,8,128], index: 10, kind: output, shape index: {1}]
  %s11 = inlined_call_operand.vmem [shape: f32[8,128], index: 11, kind: output, shape index: {2}]
  %12 = xla_tuple %s9, %s10, %s11
  %s13 = sld [smem:[#allocation0]]
  $region74: #{_decode_impl.1} parent=0
    _
  %s15 = ssub.s32 1, %s13
  %s16 = scalar_select 0, %s15, %s13
  $region1: #{_decode_impl.1} parent=0
    #allocation2 [shape = 'u8[327680]{0}', space=vmem, size = 0x50000, scoped, tag = 'input window, operand 3, single buffered']
    #allocation3 [shape = 's32[1]{0}', space=sflag, size = 0x4, scoped, tag = 'scoped memory for _decode_impl.1']
    #allocation4 [shape = 'u8[98304]{0}', space=vmem, size = 0x18000, scoped, tag = 'input window, operand 5, single buffered']
    #allocation5 [shape = 's32[1]{0}', space=sflag, size = 0x4, scoped, tag = 'scoped memory for _decode_impl.1']
    %17 = vsyncpa [#allocation3], 0
    %18 = vsyncpa [#allocation5], 0
    // Predicated region
    $region2: #{_decode_impl.1} parent=1 // pred_check
      _
    $region3: #{_decode_impl.1} parent=1 // pred_check_branch
      %20 = sbr.rel (0) target = $region5
    $region4: #{_decode_impl.1} parent=1 // pred_region
      _
    $region5: #{_decode_impl.1} parent=1 // pred_fallthru
      _
    // Predicated region
    $region6: #{_decode_impl.1} parent=1 // pred_check
      _
    $region7: #{_decode_impl.1} parent=1 // pred_check_branch
      %22 = sbr.rel (0) target = $region9
    $region8: #{_decode_impl.1} parent=1 // pred_region
      _
    $region9: #{_decode_impl.1} parent=1 // pred_fallthru
      _
    // Predicated region
    $region10: #{_decode_impl.1} parent=1 // pred_check
      _
    $region11: #{_decode_impl.1} parent=1 // pred_check_branch
      %24 = sbr.rel (0) target = $region13
    $region12: #{_decode_impl.1} parent=1 // pred_region
      _
    $region13: #{_decode_impl.1} parent=1 // pred_fallthru
      _
    // Predicated region
    $region14: #{_decode_impl.1} parent=1 // pred_check
      _
    $region15: #{_decode_impl.1} parent=1 // pred_check_branch
      %26 = sbr.rel (0) target = $region17
    $region16: #{_decode_impl.1} parent=1 // pred_region
      %s28 = ssub.s32 10240, 10240
      %29 = vsyncadd [#allocation3], %s28
      %s30 = sshll.u32 [#allocation2], 4
      %s31 = int_to_ptr.vmem [resolvable:$true] %s30
      %36 = dma.hbm_to_vmem [thread:$0]  %s3, 10240, %s31, [#allocation3], 320, 320, 20
    $region17: #{_decode_impl.1} parent=1 // pred_fallthru
      _
    // Predicated region
    $region18: #{_decode_impl.1} parent=1 // pred_check
      _
    $region19: #{_decode_impl.1} parent=1 // pred_check_branch
      %38 = sbr.rel (0) target = $region21
    $region20: #{_decode_impl.1} parent=1 // pred_region
      _
    $region21: #{_decode_impl.1} parent=1 // pred_fallthru
      _
    // Predicated region
    $region22: #{_decode_impl.1} parent=1 // pred_check
      _
    $region23: #{_decode_impl.1} parent=1 // pred_check_branch
      %40 = sbr.rel (0) target = $region25
    $region24: #{_decode_impl.1} parent=1 // pred_region
      %s42 = ssub.s32 3072, 3072
      %43 = vsyncadd [#allocation5], %s42
      %s44 = sshll.u32 [#allocation4], 4
      %s45 = int_to_ptr.vmem [resolvable:$true] %s44
      %50 = dma.hbm_to_vmem [thread:$0]  %s5, 3072, %s45, [#allocation5], 192, 192, 12
    $region25: #{_decode_impl.1} parent=1 // pred_fallthru
      _
    // Predicated region
    $region26: #{_decode_impl.1} parent=1 // pred_check
      _
    $region27: #{_decode_impl.1} parent=1 // pred_check_branch
      %52 = sbr.rel (0) target = $region29
    $region28: #{_decode_impl.1} parent=1 // pred_region
      _
    $region29: #{_decode_impl.1} parent=1 // pred_fallthru
      _
    // Predicated region
    $region30: #{_decode_impl.1} parent=1 // pred_check
      _
    $region31: #{_decode_impl.1} parent=1 // pred_check_branch
      %54 = sbr.rel (0) target = $region33
    $region32: #{_decode_impl.1} parent=1 // pred_region
      _
    $region33: #{_decode_impl.1} parent=1 // pred_fallthru
      _
    // Predicated region
    $region34: #{_decode_impl.1} parent=1 // pred_check
      _
    $region35: #{_decode_impl.1} parent=1 // pred_check_branch
      %56 = sbr.rel (0) target = $region37
    $region36: #{_decode_impl.1} parent=1 // pred_region
      _
    $region37: #{_decode_impl.1} parent=1 // pred_fallthru
      _
    // Predicated region
    $region38: #{_decode_impl.1} parent=1 // pred_check
      _
    $region39: #{_decode_impl.1} parent=1 // pred_check_branch
      %58 = sbr.rel (0) target = $region41
    $region40: #{_decode_impl.1} parent=1 // pred_region
      %59 = dma.done [#allocation3], 10240
    $region41: #{_decode_impl.1} parent=1 // pred_fallthru
      _
    // Predicated region
    $region42: #{_decode_impl.1} parent=1 // pred_check
      _
    $region43: #{_decode_impl.1} parent=1 // pred_check_branch
      %61 = sbr.rel (0) target = $region45
    $region44: #{_decode_impl.1} parent=1 // pred_region
      %62 = dma.done [#allocation5], 3072
    $region45: #{_decode_impl.1} parent=1 // pred_fallthru
      _
    %p64 = scmp.eq.s32.totalorder 0, 0
    // Predicated region
    $region46: #{_decode_impl.1} parent=1 // pred_check
      %p65 = pneg %p64
    $region47: #{_decode_impl.1} parent=1 // pred_check_branch
      %67 = sbr.rel (%p65) target = $region49
    $region48: #{_decode_impl.1} parent=1 // pred_region
      %v68 = vld [vmem:[%s1] sm:$0xff]
      %69 = vst [vmem:[%s11] sm:$0xff] %v68
    $region49: #{_decode_impl.1} parent=1 // pred_fallthru
      _
    %v70 = vld [vmem:[%s11] sm:$0xff]
    %v71 = vpack.c.bf16 %v70, %v70
    %v72 = vld [vmem:[%s0] sm:$0xff]
    %v73 = vlaneseq
    %v74 = vand.u32 %v73, 127
    %75 = vset.pattern.permute.xlu0 0
    %76 = vperm.xlu0 %75, %v72
    %v77 = vpop.permute.xlu0 %76
    %vm78 = vcmp.eq.s32.totalorder %v74, %v77
    %v79 = vsel %vm78, 1.0, 0.0
    %v80 = vpack.c.bf16 %v79, %v79
    %v81 = vld [vmem:[#allocation2] sm:$0xff]
    %v82 = vld [vmem:[#allocation2 + $0x8] sm:$0xff]
    %v83 = vld [vmem:[#allocation2 + $0x10] sm:$0xf]
    %v84 = vld [vmem:[#allocation2 + $0x14] sm:$0xff]
    %v85 = vld [vmem:[#allocation2 + $0x1c] sm:$0xff]
    %v86 = vld [vmem:[#allocation2 + $0x24] sm:$0xf]
    %v87 = vld [vmem:[#allocation2 + $0x28] sm:$0xff]
    %v88 = vld [vmem:[#allocation2 + $0x30] sm:$0xff]
    %v89 = vld [vmem:[#allocation2 + $0x38] sm:$0xf]
    %v90 = vld [vmem:[#allocation2 + $0x3c] sm:$0xff]
    %v91 = vld [vmem:[#allocation2 + $0x44] sm:$0xff]
    %v92 = vld [vmem:[#allocation2 + $0x4c] sm:$0xf]
    %v93 = vld [vmem:[#allocation2 + $0x50] sm:$0xff]
    %v94 = vld [vmem:[#allocation2 + $0x58] sm:$0xff]
    %v95 = vld [vmem:[#allocation2 + $0x60] sm:$0xf]
    %v96 = vld [vmem:[#allocation2 + $0x64] sm:$0xff]
    %v97 = vld [vmem:[#allocation2 + $0x6c] sm:$0xff]
    %v98 = vld [vmem:[#allocation2 + $0x74] sm:$0xf]
    %v99 = vld [vmem:[#allocation2 + $0x78] sm:$0xff]
    %v100 = vld [vmem:[#allocation2 + $0x80] sm:$0xff]
    %v101 = vld [vmem:[#allocation2 + $0x88] sm:$0xf]
    %v102 = vld [vmem:[#allocation2 + $0x8c] sm:$0xff]
    %v103 = vld [vmem:[#allocation2 + $0x94] sm:$0xff]
    %v104 = vld [vmem:[#allocation2 + $0x9c] sm:$0xf]
    %v105 = vld [vmem:[#allocation2 + $0xa0] sm:$0xff]
    %v106 = vld [vmem:[#allocation2 + $0xa8] sm:$0xff]
    %v107 = vld [vmem:[#allocation2 + $0xb0] sm:$0xf]
    %v108 = vld [vmem:[#allocation2 + $0xb4] sm:$0xff]
    %v109 = vld [vmem:[#allocation2 + $0xbc] sm:$0xff]
    %v110 = vld [vmem:[#allocation2 + $0xc4] sm:$0xf]
    %v111 = vld [vmem:[#allocation2 + $0xc8] sm:$0xff]
    %v112 = vld [vmem:[#allocation2 + $0xd0] sm:$0xff]
    %v113 = vld [vmem:[#allocation2 + $0xd8] sm:$0xf]
    %v114 = vld [vmem:[#allocation2 + $0xdc] sm:$0xff]
    %v115 = vld [vmem:[#allocation2 + $0xe4] sm:$0xff]
    %v116 = vld [vmem:[#allocation2 + $0xec] sm:$0xf]
    %v117 = vld [vmem:[#allocation2 + $0xf0] sm:$0xff]
    %v118 = vld [vmem:[#allocation2 + $0xf8] sm:$0xff]
    %v119 = vld [vmem:[#allocation2 + $0x100] sm:$0xf]
    %v120 = vld [vmem:[#allocation2 + $0x104] sm:$0xff]
    %v121 = vld [vmem:[#allocation2 + $0x10c] sm:$0xff]
    %v122 = vld [vmem:[#allocation2 + $0x114] sm:$0xf]
    %v123 = vld [vmem:[#allocation2 + $0x118] sm:$0xff]
    %v124 = vld [vmem:[#allocation2 + $0x120] sm:$0xff]
    %v125 = vld [vmem:[#allocation2 + $0x128] sm:$0xf]
    %v126 = vld [vmem:[#allocation2 + $0x12c] sm:$0xff]
    %v127 = vld [vmem:[#allocation2 + $0x134] sm:$0xff]
    %v128 = vld [vmem:[#allocation2 + $0x13c] sm:$0xf]
    %v129 = vld [vmem:[#allocation2 + $0x140] sm:$0xff]
    %v130 = vld [vmem:[#allocation2 + $0x148] sm:$0xff]
    %v131 = vld [vmem:[#allocation2 + $0x150] sm:$0xf]
    %v132 = vld [vmem:[#allocation2 + $0x154] sm:$0xff]
    %v133 = vld [vmem:[#allocation2 + $0x15c] sm:$0xff]
    %v134 = vld [vmem:[#allocation2 + $0x164] sm:$0xf]
    %v135 = vld [vmem:[#allocation2 + $0x168] sm:$0xff]
    %v136 = vld [vmem:[#allocation2 + $0x170] sm:$0xff]
    %v137 = vld [vmem:[#allocation2 + $0x178] sm:$0xf]
    %v138 = vld [vmem:[#allocation2 + $0x17c] sm:$0xff]
    %v139 = vld [vmem:[#allocation2 + $0x184] sm:$0xff]
    %v140 = vld [vmem:[#allocation2 + $0x18c] sm:$0xf]
    %v141 = vld [vmem:[#allocation2 + $0x190] sm:$0xff]
    %v142 = vld [vmem:[#allocation2 + $0x198] sm:$0xff]
    %v143 = vld [vmem:[#allocation2 + $0x1a0] sm:$0xf]
    %v144 = vld [vmem:[#allocation2 + $0x1a4] sm:$0xff]
    %v145 = vld [vmem:[#allocation2 + $0x1ac] sm:$0xff]
    %v146 = vld [vmem:[#allocation2 + $0x1b4] sm:$0xf]
    %v147 = vld [vmem:[#allocation2 + $0x1b8] sm:$0xff]
    %v148 = vld [vmem:[#allocation2 + $0x1c0] sm:$0xff]
    %v149 = vld [vmem:[#allocation2 + $0x1c8] sm:$0xf]
    %v150 = vld [vmem:[#allocation2 + $0x1cc] sm:$0xff]
    %v151 = vld [vmem:[#allocation2 + $0x1d4] sm:$0xff]
    %v152 = vld [vmem:[#allocation2 + $0x1dc] sm:$0xf]
    %v153 = vld [vmem:[#allocation2 + $0x1e0] sm:$0xff]
    %v154 = vld [vmem:[#allocation2 + $0x1e8] sm:$0xff]
    %v155 = vld [vmem:[#allocation2 + $0x1f0] sm:$0xf]
    %v156 = vld [vmem:[#allocation2 + $0x1f4] sm:$0xff]
    %v157 = vld [vmem:[#allocation2 + $0x1fc] sm:$0xff]
    %v158 = vld [vmem:[#allocation2 + $0x204] sm:$0xf]
    %v159 = vld [vmem:[#allocation2 + $0x208] sm:$0xff]
    %v160 = vld [vmem:[#allocation2 + $0x210] sm:$0xff]
    %v161 = vld [vmem:[#allocation2 + $0x218] sm:$0xf]
    %v162 = vld [vmem:[#allocation2 + $0x21c] sm:$0xff]
    %v163 = vld [vmem:[#allocation2 + $0x224] sm:$0xff]
    %v164 = vld [vmem:[#allocation2 + $0x22c] sm:$0xf]
    %v165 = vld [vmem:[#allocation2 + $0x230] sm:$0xff]
    %v166 = vld [vmem:[#allocation2 + $0x238] sm:$0xff]
    %v167 = vld [vmem:[#allocation2 + $0x240] sm:$0xf]
    %v168 = vld [vmem:[#allocation2 + $0x244] sm:$0xff]
    %v169 = vld [vmem:[#allocation2 + $0x24c] sm:$0xff]
    %v170 = vld [vmem:[#allocation2 + $0x254] sm:$0xf]
    %v171 = vld [vmem:[#allocation2 + $0x258] sm:$0xff]
    %v172 = vld [vmem:[#allocation2 + $0x260] sm:$0xff]
    %v173 = vld [vmem:[#allocation2 + $0x268] sm:$0xf]
    %v174 = vld [vmem:[#allocation2 + $0x26c] sm:$0xff]
    %v175 = vld [vmem:[#allocation2 + $0x274] sm:$0xff]
    %v176 = vld [vmem:[#allocation2 + $0x27c] sm:$0xf]
    %v177 = vld [vmem:[%s4] sm:$0x1f]
    %v179 = vlaneseq
    %v180 = vshrl.u32 %v179, 7
    %v181 = vsub.s32 0, %v180
    %v182 = vrot.slane %v177, %v181
    %v183 = vlaneseq
    %v184 = vshrl.u32 %v183, 7
    %v185 = vsub.s32 1, %v184
    %v186 = vrot.slane %v177, %v185
    %v187 = vlaneseq
    %v188 = vshrl.u32 %v187, 7
    %v189 = vsub.s32 2, %v188
    %v190 = vrot.slane %v177, %v189
    %v191 = vlaneseq
    %v192 = vshrl.u32 %v191, 7
    %v193 = vsub.s32 3, %v192
    %v194 = vrot.slane %v177, %v193
    %v195 = vlaneseq
    %v196 = vshrl.u32 %v195, 7
    %v197 = vsub.s32 4, %v196
    %v198 = vrot.slane %v177, %v197
    %v300 = vunpack.c.l.b16 %v81
    %v301 = vunpack.c.h.b16 %v81
    %v302 = vunpack.c.l.b16 %v82
    %v303 = vunpack.c.h.b16 %v82
    %v304 = vunpack.c.l.b16 %v83
    %v305 = vunpack.c.l.b16 %v84
    %v306 = vunpack.c.h.b16 %v84
    %v307 = vunpack.c.l.b16 %v85
    %v308 = vunpack.c.h.b16 %v85
    %v309 = vunpack.c.l.b16 %v86
    %v310 = vunpack.c.l.b16 %v87
    %v311 = vunpack.c.h.b16 %v87
    %v312 = vunpack.c.l.b16 %v88
    %v313 = vunpack.c.h.b16 %v88
    %v314 = vunpack.c.l.b16 %v89
    %v315 = vunpack.c.l.b16 %v90
    %v316 = vunpack.c.h.b16 %v90
    %v317 = vunpack.c.l.b16 %v91
    %v318 = vunpack.c.h.b16 %v91
    %v319 = vunpack.c.l.b16 %v92
    %v320 = vunpack.c.l.b16 %v93
    %v321 = vunpack.c.h.b16 %v93
    %v322 = vunpack.c.l.b16 %v94
    %v323 = vunpack.c.h.b16 %v94
    %v324 = vunpack.c.l.b16 %v95
    %v325 = vunpack.c.l.b16 %v96
    %v326 = vunpack.c.h.b16 %v96
    %v327 = vunpack.c.l.b16 %v97
    %v328 = vunpack.c.h.b16 %v97
    %v329 = vunpack.c.l.b16 %v98
    %v330 = vunpack.c.l.b16 %v99
    %v331 = vunpack.c.h.b16 %v99
    %v332 = vunpack.c.l.b16 %v100
    %v333 = vunpack.c.h.b16 %v100
    %v334 = vunpack.c.l.b16 %v101
    %v335 = vunpack.c.l.b16 %v102
    %v336 = vunpack.c.h.b16 %v102
    %v337 = vunpack.c.l.b16 %v103
    %v338 = vunpack.c.h.b16 %v103
    %v339 = vunpack.c.l.b16 %v104
    %v340 = vunpack.c.l.b16 %v105
    %v341 = vunpack.c.h.b16 %v105
    %v342 = vunpack.c.l.b16 %v106
    %v343 = vunpack.c.h.b16 %v106
    %v344 = vunpack.c.l.b16 %v107
    %v345 = vunpack.c.l.b16 %v108
    %v346 = vunpack.c.h.b16 %v108
    %v347 = vunpack.c.l.b16 %v109
    %v348 = vunpack.c.h.b16 %v109
    %v349 = vunpack.c.l.b16 %v110
    %v350 = vunpack.c.l.b16 %v111
    %v351 = vunpack.c.h.b16 %v111
    %v352 = vunpack.c.l.b16 %v112
    %v353 = vunpack.c.h.b16 %v112
    %v354 = vunpack.c.l.b16 %v113
    %v355 = vunpack.c.l.b16 %v114
    %v356 = vunpack.c.h.b16 %v114
    %v357 = vunpack.c.l.b16 %v115
    %v358 = vunpack.c.h.b16 %v115
    %v359 = vunpack.c.l.b16 %v116
    %v360 = vunpack.c.l.b16 %v117
    %v361 = vunpack.c.h.b16 %v117
    %v362 = vunpack.c.l.b16 %v118
    %v363 = vunpack.c.h.b16 %v118
    %v364 = vunpack.c.l.b16 %v119
    %v365 = vunpack.c.l.b16 %v120
    %v366 = vunpack.c.h.b16 %v120
    %v367 = vunpack.c.l.b16 %v121
    %v368 = vunpack.c.h.b16 %v121
    %v369 = vunpack.c.l.b16 %v122
    %v370 = vunpack.c.l.b16 %v123
    %v371 = vunpack.c.h.b16 %v123
    %v372 = vunpack.c.l.b16 %v124
    %v373 = vunpack.c.h.b16 %v124
    %v374 = vunpack.c.l.b16 %v125
    %v375 = vunpack.c.l.b16 %v126
    %v376 = vunpack.c.h.b16 %v126
    %v377 = vunpack.c.l.b16 %v127
    %v378 = vunpack.c.h.b16 %v127
    %v379 = vunpack.c.l.b16 %v128
    %v380 = vunpack.c.l.b16 %v129
    %v381 = vunpack.c.h.b16 %v129
    %v382 = vunpack.c.l.b16 %v130
    %v383 = vunpack.c.h.b16 %v130
    %v384 = vunpack.c.l.b16 %v131
    %v385 = vunpack.c.l.b16 %v132
    %v386 = vunpack.c.h.b16 %v132
    %v387 = vunpack.c.l.b16 %v133
    %v388 = vunpack.c.h.b16 %v133
    %v389 = vunpack.c.l.b16 %v134
    %v390 = vunpack.c.l.b16 %v135
    %v391 = vunpack.c.h.b16 %v135
    %v392 = vunpack.c.l.b16 %v136
    %v393 = vunpack.c.h.b16 %v136
    %v394 = vunpack.c.l.b16 %v137
    %v395 = vunpack.c.l.b16 %v138
    %v396 = vunpack.c.h.b16 %v138
    %v397 = vunpack.c.l.b16 %v139
    %v398 = vunpack.c.h.b16 %v139
    %v399 = vunpack.c.l.b16 %v140
    %v400 = vunpack.c.l.b16 %v141
    %v401 = vunpack.c.h.b16 %v141
    %v402 = vunpack.c.l.b16 %v142
    %v403 = vunpack.c.h.b16 %v142
    %v404 = vunpack.c.l.b16 %v143
    %v405 = vunpack.c.l.b16 %v144
    %v406 = vunpack.c.h.b16 %v144
    %v407 = vunpack.c.l.b16 %v145
    %v408 = vunpack.c.h.b16 %v145
    %v409 = vunpack.c.l.b16 %v146
    %v410 = vunpack.c.l.b16 %v147
    %v411 = vunpack.c.h.b16 %v147
    %v412 = vunpack.c.l.b16 %v148
    %v413 = vunpack.c.h.b16 %v148
    %v414 = vunpack.c.l.b16 %v149
    %v415 = vunpack.c.l.b16 %v150
    %v416 = vunpack.c.h.b16 %v150
    %v417 = vunpack.c.l.b16 %v151
    %v418 = vunpack.c.h.b16 %v151
    %v419 = vunpack.c.l.b16 %v152
    %v420 = vunpack.c.l.b16 %v153
    %v421 = vunpack.c.h.b16 %v153
    %v422 = vunpack.c.l.b16 %v154
    %v423 = vunpack.c.h.b16 %v154
    %v424 = vunpack.c.l.b16 %v155
    %v425 = vunpack.c.l.b16 %v156
    %v426 = vunpack.c.h.b16 %v156
    %v427 = vunpack.c.l.b16 %v157
    %v428 = vunpack.c.h.b16 %v157
    %v429 = vunpack.c.l.b16 %v158
    %v430 = vunpack.c.l.b16 %v159
    %v431 = vunpack.c.h.b16 %v159
    %v432 = vunpack.c.l.b16 %v160
    %v433 = vunpack.c.h.b16 %v160
    %v434 = vunpack.c.l.b16 %v161
    %v435 = vunpack.c.l.b16 %v162
    %v436 = vunpack.c.h.b16 %v162
    %v437 = vunpack.c.l.b16 %v163
    %v438 = vunpack.c.h.b16 %v163
    %v439 = vunpack.c.l.b16 %v164
    %v440 = vunpack.c.l.b16 %v165
    %v441 = vunpack.c.h.b16 %v165
    %v442 = vunpack.c.l.b16 %v166
    %v443 = vunpack.c.h.b16 %v166
    %v444 = vunpack.c.l.b16 %v167
    %v445 = vunpack.c.l.b16 %v168
    %v446 = vunpack.c.h.b16 %v168
    %v447 = vunpack.c.l.b16 %v169
    %v448 = vunpack.c.h.b16 %v169
    %v449 = vunpack.c.l.b16 %v170
    %v450 = vunpack.c.l.b16 %v171
    %v451 = vunpack.c.h.b16 %v171
    %v452 = vunpack.c.l.b16 %v172
    %v453 = vunpack.c.h.b16 %v172
    %v454 = vunpack.c.l.b16 %v173
    %v455 = vunpack.c.l.b16 %v174
    %v456 = vunpack.c.h.b16 %v174
    %v457 = vunpack.c.l.b16 %v175
    %v458 = vunpack.c.h.b16 %v175
    %v459 = vunpack.c.l.b16 %v176
    %v460 = vpack.c.b16 %v305, %v300
    %v461 = vpack.c.b16 %v306, %v301
    %v462 = vpack.c.b16 %v307, %v302
    %v463 = vpack.c.b16 %v308, %v303
    %v464 = vpack.c.b16 %v309, %v304
    %v465 = vpack.c.b16 %v315, %v310
    %v466 = vpack.c.b16 %v316, %v311
    %v467 = vpack.c.b16 %v317, %v312
    %v468 = vpack.c.b16 %v318, %v313
    %v469 = vpack.c.b16 %v319, %v314
    %v470 = vpack.c.b16 %v325, %v320
    %v471 = vpack.c.b16 %v326, %v321
    %v472 = vpack.c.b16 %v327, %v322
    %v473 = vpack.c.b16 %v328, %v323
    %v474 = vpack.c.b16 %v329, %v324
    %v475 = vpack.c.b16 %v335, %v330
    %v476 = vpack.c.b16 %v336, %v331
    %v477 = vpack.c.b16 %v337, %v332
    %v478 = vpack.c.b16 %v338, %v333
    %v479 = vpack.c.b16 %v339, %v334
    %v480 = vpack.c.b16 %v345, %v340
    %v481 = vpack.c.b16 %v346, %v341
    %v482 = vpack.c.b16 %v347, %v342
    %v483 = vpack.c.b16 %v348, %v343
    %v484 = vpack.c.b16 %v349, %v344
    %v485 = vpack.c.b16 %v355, %v350
    %v486 = vpack.c.b16 %v356, %v351
    %v487 = vpack.c.b16 %v357, %v352
    %v488 = vpack.c.b16 %v358, %v353
    %v489 = vpack.c.b16 %v359, %v354
    %v490 = vpack.c.b16 %v365, %v360
    %v491 = vpack.c.b16 %v366, %v361
    %v492 = vpack.c.b16 %v367, %v362
    %v493 = vpack.c.b16 %v368, %v363
    %v494 = vpack.c.b16 %v369, %v364
    %v495 = vpack.c.b16 %v375, %v370
    %v496 = vpack.c.b16 %v376, %v371
    %v497 = vpack.c.b16 %v377, %v372
    %v498 = vpack.c.b16 %v378, %v373
    %v499 = vpack.c.b16 %v379, %v374
    %v500 = vpack.c.b16 %v385, %v380
    %v501 = vpack.c.b16 %v386, %v381
    %v502 = vpack.c.b16 %v387, %v382
    %v503 = vpack.c.b16 %v388, %v383
    %v504 = vpack.c.b16 %v389, %v384
    %v505 = vpack.c.b16 %v395, %v390
    %v506 = vpack.c.b16 %v396, %v391
    %v507 = vpack.c.b16 %v397, %v392
    %v508 = vpack.c.b16 %v398, %v393
    %v509 = vpack.c.b16 %v399, %v394
    %v510 = vpack.c.b16 %v405, %v400
    %v511 = vpack.c.b16 %v406, %v401
    %v512 = vpack.c.b16 %v407, %v402
    %v513 = vpack.c.b16 %v408, %v403
    %v514 = vpack.c.b16 %v409, %v404
    %v515 = vpack.c.b16 %v415, %v410
    %v516 = vpack.c.b16 %v416, %v411
    %v517 = vpack.c.b16 %v417, %v412
    %v518 = vpack.c.b16 %v418, %v413
    %v519 = vpack.c.b16 %v419, %v414
    %v520 = vpack.c.b16 %v425, %v420
    %v521 = vpack.c.b16 %v426, %v421
    %v522 = vpack.c.b16 %v427, %v422
    %v523 = vpack.c.b16 %v428, %v423
    %v524 = vpack.c.b16 %v429, %v424
    %v525 = vpack.c.b16 %v435, %v430
    %v526 = vpack.c.b16 %v436, %v431
    %v527 = vpack.c.b16 %v437, %v432
    %v528 = vpack.c.b16 %v438, %v433
    %v529 = vpack.c.b16 %v439, %v434
    %v530 = vpack.c.b16 %v445, %v440
    %v531 = vpack.c.b16 %v446, %v441
    %v532 = vpack.c.b16 %v447, %v442
    %v533 = vpack.c.b16 %v448, %v443
    %v534 = vpack.c.b16 %v449, %v444
    %v535 = vpack.c.b16 %v455, %v450
    %v536 = vpack.c.b16 %v456, %v451
    %v537 = vpack.c.b16 %v457, %v452
    %v538 = vpack.c.b16 %v458, %v453
    %v539 = vpack.c.b16 %v459, %v454
    %620 = vmatprep.subr.bf16.mxu0 %v461
    %621 = vmatpush1.bf16.msra.mxu0 %v460
    %622 = vmatprep.subr.bf16.mxu0 %v466
    %623 = vmatpush1.bf16.msra.mxu0 %v465
    %624 = vmatprep.subr.bf16.mxu0 %v471
    %625 = vmatpush1.bf16.msra.mxu0 %v470
    %626 = vmatprep.subr.bf16.mxu0 %v476
    %627 = vmatpush1.bf16.msra.mxu0 %v475
    %628 = vmatprep.subr.bf16.mxu0 %v481
    %629 = vmatpush1.bf16.msra.mxu0 %v480
    %630 = vmatprep.subr.bf16.mxu0 %v486
    %631 = vmatpush1.bf16.msra.mxu0 %v485
    %632 = vmatprep.subr.bf16.mxu0 %v491
    %633 = vmatpush1.bf16.msra.mxu0 %v490
    %634 = vmatprep.subr.bf16.mxu0 %v496
    %635 = vmatpush1.bf16.msra.mxu0 %v495
    %636 = vmatprep.subr.bf16.mxu0 %v501
    %637 = vmatpush1.bf16.msra.mxu0 %v500
    %638 = vmatprep.subr.bf16.mxu0 %v506
    %639 = vmatpush1.bf16.msra.mxu0 %v505
    %640 = vmatprep.subr.bf16.mxu0 %v511
    %641 = vmatpush1.bf16.msra.mxu0 %v510
    %642 = vmatprep.subr.bf16.mxu0 %v516
    %643 = vmatpush1.bf16.msra.mxu0 %v515
    %644 = vmatprep.subr.bf16.mxu0 %v521
    %645 = vmatpush1.bf16.msra.mxu0 %v520
    %646 = vmatprep.subr.bf16.mxu0 %v526
    %647 = vmatpush1.bf16.msra.mxu0 %v525
    %648 = vmatprep.subr.bf16.mxu0 %v531
    %649 = vmatpush1.bf16.msra.mxu0 %v530
    %650 = vmatprep.subr.bf16.mxu0 %v536
    %651 = vmatpush1.bf16.msra.mxu0 %v535
    %652 = vmatprep.mubr.bf16.mxu0 %v71
    %653 = vmatmul.mubr.bf16.gmra.mrb[0].mxu0 %v80
    %v654 = vpop.f32.mrb[0].mxu0
    %v655 = vadd.f32 %v182, %v654
    %v656 = vpop.f32.mrb[0].mxu0
    %v657 = vadd.f32 %v186, %v656
    %v658 = vpop.f32.mrb[0].mxu0
    %v659 = vpop.f32.mrb[0].mxu0
    %660 = vdwg.mxu0
    %661 = vmatprep.subr.bf16.mxu0 %v463
    %662 = vmatpush1.bf16.msra.mxu0 %v462
    %663 = vmatprep.subr.bf16.mxu0 %v468
    %664 = vmatpush1.bf16.msra.mxu0 %v467
    %665 = vmatprep.subr.bf16.mxu0 %v473
    %666 = vmatpush1.bf16.msra.mxu0 %v472
    %667 = vmatprep.subr.bf16.mxu0 %v478
    %668 = vmatpush1.bf16.msra.mxu0 %v477
    %669 = vmatprep.subr.bf16.mxu0 %v483
    %670 = vmatpush1.bf16.msra.mxu0 %v482
    %671 = vmatprep.subr.bf16.mxu0 %v488
    %672 = vmatpush1.bf16.msra.mxu0 %v487
    %673 = vmatprep.subr.bf16.mxu0 %v493
    %674 = vmatpush1.bf16.msra.mxu0 %v492
    %675 = vmatprep.subr.bf16.mxu0 %v498
    %676 = vmatpush1.bf16.msra.mxu0 %v497
    %677 = vmatprep.subr.bf16.mxu0 %v503
    %678 = vmatpush1.bf16.msra.mxu0 %v502
    %679 = vmatprep.subr.bf16.mxu0 %v508
    %680 = vmatpush1.bf16.msra.mxu0 %v507
    %681 = vmatprep.subr.bf16.mxu0 %v513
    %682 = vmatpush1.bf16.msra.mxu0 %v512
    %683 = vmatprep.subr.bf16.mxu0 %v518
    %684 = vmatpush1.bf16.msra.mxu0 %v517
    %685 = vmatprep.subr.bf16.mxu0 %v523
    %686 = vmatpush1.bf16.msra.mxu0 %v522
    %687 = vmatprep.subr.bf16.mxu0 %v528
    %688 = vmatpush1.bf16.msra.mxu0 %v527
    %689 = vmatprep.subr.bf16.mxu0 %v533
    %690 = vmatpush1.bf16.msra.mxu0 %v532
    %691 = vmatprep.subr.bf16.mxu0 %v538
    %692 = vmatpush1.bf16.msra.mxu0 %v537
    %693 = vmatprep.mubr.bf16.mxu0 %v71
    %694 = vmatmul.mubr.bf16.gmra.mrb[0].mxu0 %v80
    %v695 = vpop.f32.mrb[0].mxu0
    %v696 = vadd.f32 %v190, %v695
    %v697 = vpop.f32.mrb[0].mxu0
    %v698 = vadd.f32 %v194, %v697
    %v699 = vpop.f32.mrb[0].mxu0
    %v700 = vpop.f32.mrb[0].mxu0
    %701 = vdwg.mxu0
    %702 = vmatprep.subr.bf16.mxu0 0
    %703 = vmatpush1.bf16.msra.mxu0 %v464
    %704 = vmatprep.subr.bf16.mxu0 0
    %705 = vmatpush1.bf16.msra.mxu0 %v469
    %706 = vmatprep.subr.bf16.mxu0 0
    %707 = vmatpush1.bf16.msra.mxu0 %v474
    %708 = vmatprep.subr.bf16.mxu0 0
    %709 = vmatpush1.bf16.msra.mxu0 %v479
    %710 = vmatprep.subr.bf16.mxu0 0
    %711 = vmatpush1.bf16.msra.mxu0 %v484
    %712 = vmatprep.subr.bf16.mxu0 0
    %713 = vmatpush1.bf16.msra.mxu0 %v489
    %714 = vmatprep.subr.bf16.mxu0 0
    %715 = vmatpush1.bf16.msra.mxu0 %v494
    %716 = vmatprep.subr.bf16.mxu0 0
    %717 = vmatpush1.bf16.msra.mxu0 %v499
    %718 = vmatprep.subr.bf16.mxu0 0
    %719 = vmatpush1.bf16.msra.mxu0 %v504
    %720 = vmatprep.subr.bf16.mxu0 0
    %721 = vmatpush1.bf16.msra.mxu0 %v509
    %722 = vmatprep.subr.bf16.mxu0 0
    %723 = vmatpush1.bf16.msra.mxu0 %v514
    %724 = vmatprep.subr.bf16.mxu0 0
    %725 = vmatpush1.bf16.msra.mxu0 %v519
    %726 = vmatprep.subr.bf16.mxu0 0
    %727 = vmatpush1.bf16.msra.mxu0 %v524
    %728 = vmatprep.subr.bf16.mxu0 0
    %729 = vmatpush1.bf16.msra.mxu0 %v529
    %730 = vmatprep.subr.bf16.mxu0 0
    %731 = vmatpush1.bf16.msra.mxu0 %v534
    %732 = vmatprep.subr.bf16.mxu0 0
    %733 = vmatpush1.bf16.msra.mxu0 %v539
    %734 = vmatprep.mubr.bf16.mxu0 %v71
    %735 = vmatmul.mubr.bf16.gmra.mrb[0].mxu0 %v80
    %v736 = vpop.f32.mrb[0].mxu0
    %v737 = vadd.f32 %v198, %v736
    %v738 = vpop.f32.mrb[0].mxu0
    %v739 = vpop.f32.mrb[0].mxu0
    %v740 = vpop.f32.mrb[0].mxu0
    %741 = vdwg.mxu0
    %742 = vmax.xlane.f32.xlu0 %v655
    %v743 = vpop.xlane.xlu0 %742
    %v744 = vsub.f32 %v655, %v743
    %v745 = vmul.f32 %v744, 1.442695
    %v746 = vpow.pop %v745
    %747 = vadd.xlane.f32.xlu0 %v746
    %v748 = vpop.xlane.xlu0 %747
    %v749 = vrcp.pop %v748
    %v750 = vmul.f32 %v746, %v749
    %751 = vst [vmem:[%s10] sm:$0xff] %v750
    %v752 = vpack.c.bf16 %v750, %v750
    %v753 = vld [vmem:[%s2] sm:$0xf]
    %v754 = vld [vmem:[%s2 + $0x4] sm:$0xf]
    %v755 = vld [vmem:[%s2 + $0x8] sm:$0xf]
    %v756 = vld [vmem:[%s2 + $0xc] sm:$0xf]
    %v757 = vld [vmem:[%s2 + $0x10] sm:$0xf]
    %v758 = vld [vmem:[%s2 + $0x14] sm:$0xf]
    %v759 = vld [vmem:[%s2 + $0x18] sm:$0xf]
    %v760 = vld [vmem:[%s2 + $0x1c] sm:$0xf]
    %v761 = vld [vmem:[%s2 + $0x20] sm:$0xf]
    %v762 = vld [vmem:[%s2 + $0x24] sm:$0xf]
    %v763 = vld [vmem:[%s2 + $0x28] sm:$0xf]
    %v764 = vld [vmem:[%s2 + $0x2c] sm:$0xf]
    %v765 = vld [vmem:[%s2 + $0x30] sm:$0xf]
    %v766 = vld [vmem:[%s2 + $0x34] sm:$0xf]
    %v767 = vld [vmem:[%s2 + $0x38] sm:$0xf]
    %v768 = vld [vmem:[%s2 + $0x3c] sm:$0xf]
    %v785 = vunpack.c.l.b16 %v753
    %v786 = vunpack.c.l.b16 %v754
    %v787 = vunpack.c.l.b16 %v755
    %v788 = vunpack.c.l.b16 %v756
    %v789 = vunpack.c.l.b16 %v757
    %v790 = vunpack.c.l.b16 %v758
    %v791 = vunpack.c.l.b16 %v759
    %v792 = vunpack.c.l.b16 %v760
    %v793 = vunpack.c.l.b16 %v761
    %v794 = vunpack.c.l.b16 %v762
    %v795 = vunpack.c.l.b16 %v763
    %v796 = vunpack.c.l.b16 %v764
    %v797 = vunpack.c.l.b16 %v765
    %v798 = vunpack.c.l.b16 %v766
    %v799 = vunpack.c.l.b16 %v767
    %v800 = vunpack.c.l.b16 %v768
    %v801 = vpack.c.b16 %v786, %v785
    %v802 = vpack.c.b16 %v788, %v787
    %v803 = vpack.c.b16 %v790, %v789
    %v804 = vpack.c.b16 %v792, %v791
    %v805 = vpack.c.b16 %v794, %v793
    %v806 = vpack.c.b16 %v796, %v795
    %v807 = vpack.c.b16 %v798, %v797
    %v808 = vpack.c.b16 %v800, %v799
    %817 = vmatprep.subr.bf16.mxu0 0
    %818 = vmatpush1.bf16.msra.mxu0 %v801
    %819 = vmatprep.subr.bf16.mxu0 0
    %820 = vmatpush1.bf16.msra.mxu0 %v802
    %821 = vmatprep.subr.bf16.mxu0 0
    %822 = vmatpush1.bf16.msra.mxu0 %v803
    %823 = vmatprep.subr.bf16.mxu0 0
    %824 = vmatpush1.bf16.msra.mxu0 %v804
    %825 = vmatprep.subr.bf16.mxu0 0
    %826 = vmatpush1.bf16.msra.mxu0 %v805
    %827 = vmatprep.subr.bf16.mxu0 0
    %828 = vmatpush1.bf16.msra.mxu0 %v806
    %829 = vmatprep.subr.bf16.mxu0 0
    %830 = vmatpush1.bf16.msra.mxu0 %v807
    %831 = vmatprep.subr.bf16.mxu0 0
    %832 = vmatpush1.bf16.msra.mxu0 %v808
    %833 = vmatprep.subr.bf16.mxu0 0
    %834 = vmatpush1.bf16.msra.mxu0 0
    %835 = vmatprep.subr.bf16.mxu0 0
    %836 = vmatpush1.bf16.msra.mxu0 0
    %837 = vmatprep.subr.bf16.mxu0 0
    %838 = vmatpush1.bf16.msra.mxu0 0
    %839 = vmatprep.subr.bf16.mxu0 0
    %840 = vmatpush1.bf16.msra.mxu0 0
    %841 = vmatprep.subr.bf16.mxu0 0
    %842 = vmatpush1.bf16.msra.mxu0 0
    %843 = vmatprep.subr.bf16.mxu0 0
    %844 = vmatpush1.bf16.msra.mxu0 0
    %845 = vmatprep.subr.bf16.mxu0 0
    %846 = vmatpush1.bf16.msra.mxu0 0
    %847 = vmatprep.subr.bf16.mxu0 0
    %848 = vmatpush1.bf16.msra.mxu0 0
    %849 = vmatprep.mubr.bf16.mxu0 0
    %850 = vmatmul.mubr.bf16.gmra.mrb[0].mxu0 %v752
    %v851 = vpop.f32.mrb[0].mxu0
    %v852 = vadd.f32 0.0, %v851
    %v853 = vpop.f32.mrb[0].mxu0
    %v854 = vpop.f32.mrb[0].mxu0
    %v855 = vpop.f32.mrb[0].mxu0
    %856 = vdwg.mxu0
    %v857 = vadd.f32 %v657, %v852
    %v858 = vmax.f32 %v857, 0.0
    %v859 = vpack.c.bf16 %v858, %v858
    %v860 = vld [vmem:[#allocation4] sm:$0xff]
    %v861 = vld [vmem:[#allocation4 + $0x8] sm:$0xf]
    %v862 = vld [vmem:[#allocation4 + $0xc] sm:$0xff]
    %v863 = vld [vmem:[#allocation4 + $0x14] sm:$0xf]
    %v864 = vld [vmem:[#allocation4 + $0x18] sm:$0xff]
    %v865 = vld [vmem:[#allocation4 + $0x20] sm:$0xf]
    %v866 = vld [vmem:[#allocation4 + $0x24] sm:$0xff]
    %v867 = vld [vmem:[#allocation4 + $0x2c] sm:$0xf]
    %v868 = vld [vmem:[#allocation4 + $0x30] sm:$0xff]
    %v869 = vld [vmem:[#allocation4 + $0x38] sm:$0xf]
    %v870 = vld [vmem:[#allocation4 + $0x3c] sm:$0xff]
    %v871 = vld [vmem:[#allocation4 + $0x44] sm:$0xf]
    %v872 = vld [vmem:[#allocation4 + $0x48] sm:$0xff]
    %v873 = vld [vmem:[#allocation4 + $0x50] sm:$0xf]
    %v874 = vld [vmem:[#allocation4 + $0x54] sm:$0xff]
    %v875 = vld [vmem:[#allocation4 + $0x5c] sm:$0xf]
    %v876 = vld [vmem:[#allocation4 + $0x60] sm:$0xff]
    %v877 = vld [vmem:[#allocation4 + $0x68] sm:$0xf]
    %v878 = vld [vmem:[#allocation4 + $0x6c] sm:$0xff]
    %v879 = vld [vmem:[#allocation4 + $0x74] sm:$0xf]
    %v880 = vld [vmem:[#allocation4 + $0x78] sm:$0xff]
    %v881 = vld [vmem:[#allocation4 + $0x80] sm:$0xf]
    %v882 = vld [vmem:[#allocation4 + $0x84] sm:$0xff]
    %v883 = vld [vmem:[#allocation4 + $0x8c] sm:$0xf]
    %v884 = vld [vmem:[#allocation4 + $0x90] sm:$0xff]
    %v885 = vld [vmem:[#allocation4 + $0x98] sm:$0xf]
    %v886 = vld [vmem:[#allocation4 + $0x9c] sm:$0xff]
    %v887 = vld [vmem:[#allocation4 + $0xa4] sm:$0xf]
    %v888 = vld [vmem:[#allocation4 + $0xa8] sm:$0xff]
    %v889 = vld [vmem:[#allocation4 + $0xb0] sm:$0xf]
    %v890 = vld [vmem:[#allocation4 + $0xb4] sm:$0xff]
    %v891 = vld [vmem:[#allocation4 + $0xbc] sm:$0xf]
    %v892 = vld [vmem:[%s6] sm:$0x7]
    %v894 = vlaneseq
    %v895 = vshrl.u32 %v894, 7
    %v896 = vsub.s32 0, %v895
    %v897 = vrot.slane %v892, %v896
    %v898 = vlaneseq
    %v899 = vshrl.u32 %v898, 7
    %v900 = vsub.s32 1, %v899
    %v901 = vrot.slane %v892, %v900
    %v902 = vlaneseq
    %v903 = vshrl.u32 %v902, 7
    %v904 = vsub.s32 2, %v903
    %v905 = vrot.slane %v892, %v904
    %v941 = vunpack.c.l.b16 %v860
    %v942 = vunpack.c.h.b16 %v860
    %v943 = vunpack.c.l.b16 %v861
    %v944 = vunpack.c.l.b16 %v862
    %v945 = vunpack.c.h.b16 %v862
    %v946 = vunpack.c.l.b16 %v863
    %v947 = vunpack.c.l.b16 %v864
    %v948 = vunpack.c.h.b16 %v864
    %v949 = vunpack.c.l.b16 %v865
    %v950 = vunpack.c.l.b16 %v866
    %v951 = vunpack.c.h.b16 %v866
    %v952 = vunpack.c.l.b16 %v867
    %v953 = vunpack.c.l.b16 %v868
    %v954 = vunpack.c.h.b16 %v868
    %v955 = vunpack.c.l.b16 %v869
    %v956 = vunpack.c.l.b16 %v870
    %v957 = vunpack.c.h.b16 %v870
    %v958 = vunpack.c.l.b16 %v871
    %v959 = vunpack.c.l.b16 %v872
    %v960 = vunpack.c.h.b16 %v872
    %v961 = vunpack.c.l.b16 %v873
    %v962 = vunpack.c.l.b16 %v874
    %v963 = vunpack.c.h.b16 %v874
    %v964 = vunpack.c.l.b16 %v875
    %v965 = vunpack.c.l.b16 %v876
    %v966 = vunpack.c.h.b16 %v876
    %v967 = vunpack.c.l.b16 %v877
    %v968 = vunpack.c.l.b16 %v878
    %v969 = vunpack.c.h.b16 %v878
    %v970 = vunpack.c.l.b16 %v879
    %v971 = vunpack.c.l.b16 %v880
    %v972 = vunpack.c.h.b16 %v880
    %v973 = vunpack.c.l.b16 %v881
    %v974 = vunpack.c.l.b16 %v882
    %v975 = vunpack.c.h.b16 %v882
    %v976 = vunpack.c.l.b16 %v883
    %v977 = vunpack.c.l.b16 %v884
    %v978 = vunpack.c.h.b16 %v884
    %v979 = vunpack.c.l.b16 %v885
    %v980 = vunpack.c.l.b16 %v886
    %v981 = vunpack.c.h.b16 %v886
    %v982 = vunpack.c.l.b16 %v887
    %v983 = vunpack.c.l.b16 %v888
    %v984 = vunpack.c.h.b16 %v888
    %v985 = vunpack.c.l.b16 %v889
    %v986 = vunpack.c.l.b16 %v890
    %v987 = vunpack.c.h.b16 %v890
    %v988 = vunpack.c.l.b16 %v891
    %v989 = vpack.c.b16 %v944, %v941
    %v990 = vpack.c.b16 %v945, %v942
    %v991 = vpack.c.b16 %v946, %v943
    %v992 = vpack.c.b16 %v950, %v947
    %v993 = vpack.c.b16 %v951, %v948
    %v994 = vpack.c.b16 %v952, %v949
    %v995 = vpack.c.b16 %v956, %v953
    %v996 = vpack.c.b16 %v957, %v954
    %v997 = vpack.c.b16 %v958, %v955
    %v998 = vpack.c.b16 %v962, %v959
    %v999 = vpack.c.b16 %v963, %v960
    %v1000 = vpack.c.b16 %v964, %v961
    %v1001 = vpack.c.b16 %v968, %v965
    %v1002 = vpack.c.b16 %v969, %v966
    %v1003 = vpack.c.b16 %v970, %v967
    %v1004 = vpack.c.b16 %v974, %v971
    %v1005 = vpack.c.b16 %v975, %v972
    %v1006 = vpack.c.b16 %v976, %v973
    %v1007 = vpack.c.b16 %v980, %v977
    %v1008 = vpack.c.b16 %v981, %v978
    %v1009 = vpack.c.b16 %v982, %v979
    %v1010 = vpack.c.b16 %v986, %v983
    %v1011 = vpack.c.b16 %v987, %v984
    %v1012 = vpack.c.b16 %v988, %v985
    %1037 = vmatprep.subr.bf16.mxu0 %v990
    %1038 = vmatpush1.bf16.msra.mxu0 %v989
    %1039 = vmatprep.subr.bf16.mxu0 %v993
    %1040 = vmatpush1.bf16.msra.mxu0 %v992
    %1041 = vmatprep.subr.bf16.mxu0 %v996
    %1042 = vmatpush1.bf16.msra.mxu0 %v995
    %1043 = vmatprep.subr.bf16.mxu0 %v999
    %1044 = vmatpush1.bf16.msra.mxu0 %v998
    %1045 = vmatprep.subr.bf16.mxu0 %v1002
    %1046 = vmatpush1.bf16.msra.mxu0 %v1001
    %1047 = vmatprep.subr.bf16.mxu0 %v1005
    %1048 = vmatpush1.bf16.msra.mxu0 %v1004
    %1049 = vmatprep.subr.bf16.mxu0 %v1008
    %1050 = vmatpush1.bf16.msra.mxu0 %v1007
    %1051 = vmatprep.subr.bf16.mxu0 %v1011
    %1052 = vmatpush1.bf16.msra.mxu0 %v1010
    %1053 = vmatprep.subr.bf16.mxu0 0
    %1054 = vmatpush1.bf16.msra.mxu0 0
    %1055 = vmatprep.subr.bf16.mxu0 0
    %1056 = vmatpush1.bf16.msra.mxu0 0
    %1057 = vmatprep.subr.bf16.mxu0 0
    %1058 = vmatpush1.bf16.msra.mxu0 0
    %1059 = vmatprep.subr.bf16.mxu0 0
    %1060 = vmatpush1.bf16.msra.mxu0 0
    %1061 = vmatprep.subr.bf16.mxu0 0
    %1062 = vmatpush1.bf16.msra.mxu0 0
    %1063 = vmatprep.subr.bf16.mxu0 0
    %1064 = vmatpush1.bf16.msra.mxu0 0
    %1065 = vmatprep.subr.bf16.mxu0 0
    %1066 = vmatpush1.bf16.msra.mxu0 0
    %1067 = vmatprep.subr.bf16.mxu0 0
    %1068 = vmatpush1.bf16.msra.mxu0 0
    %1069 = vmatprep.mubr.bf16.mxu0 0
    %1070 = vmatmul.mubr.bf16.gmra.mrb[0].mxu0 %v859
    %v1071 = vpop.f32.mrb[0].mxu0
    %v1072 = vadd.f32 %v897, %v1071
    %v1073 = vpop.f32.mrb[0].mxu0
    %v1074 = vadd.f32 %v901, %v1073
    %v1075 = vpop.f32.mrb[0].mxu0
    %v1076 = vpop.f32.mrb[0].mxu0
    %1077 = vdwg.mxu0
    %1078 = vmatprep.subr.bf16.mxu0 0
    %1079 = vmatpush1.bf16.msra.mxu0 %v991
    %1080 = vmatprep.subr.bf16.mxu0 0
    %1081 = vmatpush1.bf16.msra.mxu0 %v994
    %1082 = vmatprep.subr.bf16.mxu0 0
    %1083 = vmatpush1.bf16.msra.mxu0 %v997
    %1084 = vmatprep.subr.bf16.mxu0 0
    %1085 = vmatpush1.bf16.msra.mxu0 %v1000
    %1086 = vmatprep.subr.bf16.mxu0 0
    %1087 = vmatpush1.bf16.msra.mxu0 %v1003
    %1088 = vmatprep.subr.bf16.mxu0 0
    %1089 = vmatpush1.bf16.msra.mxu0 %v1006
    %1090 = vmatprep.subr.bf16.mxu0 0
    %1091 = vmatpush1.bf16.msra.mxu0 %v1009
    %1092 = vmatprep.subr.bf16.mxu0 0
    %1093 = vmatpush1.bf16.msra.mxu0 %v1012
    %1094 = vmatprep.subr.bf16.mxu0 0
    %1095 = vmatpush1.bf16.msra.mxu0 0
    %1096 = vmatprep.subr.bf16.mxu0 0
    %1097 = vmatpush1.bf16.msra.mxu0 0
    %1098 = vmatprep.subr.bf16.mxu0 0
    %1099 = vmatpush1.bf16.msra.mxu0 0
    %1100 = vmatprep.subr.bf16.mxu0 0
    %1101 = vmatpush1.bf16.msra.mxu0 0
    %1102 = vmatprep.subr.bf16.mxu0 0
    %1103 = vmatpush1.bf16.msra.mxu0 0
    %1104 = vmatprep.subr.bf16.mxu0 0
    %1105 = vmatpush1.bf16.msra.mxu0 0
    %1106 = vmatprep.subr.bf16.mxu0 0
    %1107 = vmatpush1.bf16.msra.mxu0 0
    %1108 = vmatprep.subr.bf16.mxu0 0
    %1109 = vmatpush1.bf16.msra.mxu0 0
    %1110 = vmatprep.mubr.bf16.mxu0 0
    %1111 = vmatmul.mubr.bf16.gmra.mrb[0].mxu0 %v859
    %v1112 = vpop.f32.mrb[0].mxu0
    %v1113 = vadd.f32 %v905, %v1112
    %v1114 = vpop.f32.mrb[0].mxu0
    %v1115 = vpop.f32.mrb[0].mxu0
    %v1116 = vpop.f32.mrb[0].mxu0
    %1117 = vdwg.mxu0
    %v1118 = vadd.f32 %v1072, %v696
    %v1119 = vxor.u32 %v1118, 2147483648
    %v1120 = vmul.f32 %v1119, 1.442695
    %v1121 = vpow.pop %v1120
    %v1122 = vadd.f32 %v1121, 1.0
    %v1123 = vrcp.pop %v1122
    %v1124 = vmul.f32 1.0, %v1123
    %v1125 = vadd.f32 %v1074, %v698
    %v1126 = vxor.u32 %v1125, 2147483648
    %v1127 = vmul.f32 %v1126, 1.442695
    %v1128 = vpow.pop %v1127
    %v1129 = vadd.f32 %v1128, 1.0
    %v1130 = vrcp.pop %v1129
    %v1131 = vmul.f32 1.0, %v1130
    %v1132 = vmul.f32 %v1124, %v737
    %v1133 = vadd.f32 %v1113, %v1132
    %v1134 = vtanh.pop %v1133
    %v1135 = vsub.f32 1.0, %v1131
    %v1136 = vmul.f32 %v1135, %v1134
    %v1137 = vmul.f32 %v1131, %v70
    %v1138 = vadd.f32 %v1136, %v1137
    %1139 = vst [vmem:[%s11] sm:$0xff] %v1138
    %v1140 = vpack.c.bf16 %v1138, %v1138
    %v1141 = vld [vmem:[%s7] sm:$0xf]
    %v1142 = vld [vmem:[%s7 + $0x4] sm:$0xf]
    %v1143 = vld [vmem:[%s7 + $0x8] sm:$0xf]
    %v1144 = vld [vmem:[%s7 + $0xc] sm:$0xf]
    %v1145 = vld [vmem:[%s7 + $0x10] sm:$0xf]
    %v1146 = vld [vmem:[%s7 + $0x14] sm:$0xf]
    %v1147 = vld [vmem:[%s7 + $0x18] sm:$0xf]
    %v1148 = vld [vmem:[%s7 + $0x1c] sm:$0xf]
    %v1149 = vld [vmem:[%s7 + $0x20] sm:$0xf]
    %v1150 = vld [vmem:[%s7 + $0x24] sm:$0xf]
    %v1151 = vld [vmem:[%s7 + $0x28] sm:$0xf]
    %v1152 = vld [vmem:[%s7 + $0x2c] sm:$0xf]
    %v1153 = vld [vmem:[%s7 + $0x30] sm:$0xf]
    %v1154 = vld [vmem:[%s7 + $0x34] sm:$0xf]
    %v1155 = vld [vmem:[%s7 + $0x38] sm:$0xf]
    %v1156 = vld [vmem:[%s7 + $0x3c] sm:$0xf]
    %v1157 = vld [vmem:[%s8] sm:$0x1]
    %v1159 = vlaneseq
    %v1160 = vshrl.u32 %v1159, 7
    %v1161 = vsub.s32 0, %v1160
    %v1162 = vrot.slane %v1157, %v1161
    %v1180 = vunpack.c.l.b16 %v1141
    %v1181 = vunpack.c.l.b16 %v1142
    %v1182 = vunpack.c.l.b16 %v1143
    %v1183 = vunpack.c.l.b16 %v1144
    %v1184 = vunpack.c.l.b16 %v1145
    %v1185 = vunpack.c.l.b16 %v1146
    %v1186 = vunpack.c.l.b16 %v1147
    %v1187 = vunpack.c.l.b16 %v1148
    %v1188 = vunpack.c.l.b16 %v1149
    %v1189 = vunpack.c.l.b16 %v1150
    %v1190 = vunpack.c.l.b16 %v1151
    %v1191 = vunpack.c.l.b16 %v1152
    %v1192 = vunpack.c.l.b16 %v1153
    %v1193 = vunpack.c.l.b16 %v1154
    %v1194 = vunpack.c.l.b16 %v1155
    %v1195 = vunpack.c.l.b16 %v1156
    %v1196 = vpack.c.b16 %v1181, %v1180
    %v1197 = vpack.c.b16 %v1183, %v1182
    %v1198 = vpack.c.b16 %v1185, %v1184
    %v1199 = vpack.c.b16 %v1187, %v1186
    %v1200 = vpack.c.b16 %v1189, %v1188
    %v1201 = vpack.c.b16 %v1191, %v1190
    %v1202 = vpack.c.b16 %v1193, %v1192
    %v1203 = vpack.c.b16 %v1195, %v1194
    %1212 = vmatprep.subr.bf16.mxu0 0
    %1213 = vmatpush1.bf16.msra.mxu0 %v1196
    %1214 = vmatprep.subr.bf16.mxu0 0
    %1215 = vmatpush1.bf16.msra.mxu0 %v1197
    %1216 = vmatprep.subr.bf16.mxu0 0
    %1217 = vmatpush1.bf16.msra.mxu0 %v1198
    %1218 = vmatprep.subr.bf16.mxu0 0
    %1219 = vmatpush1.bf16.msra.mxu0 %v1199
    %1220 = vmatprep.subr.bf16.mxu0 0
    %1221 = vmatpush1.bf16.msra.mxu0 %v1200
    %1222 = vmatprep.subr.bf16.mxu0 0
    %1223 = vmatpush1.bf16.msra.mxu0 %v1201
    %1224 = vmatprep.subr.bf16.mxu0 0
    %1225 = vmatpush1.bf16.msra.mxu0 %v1202
    %1226 = vmatprep.subr.bf16.mxu0 0
    %1227 = vmatpush1.bf16.msra.mxu0 %v1203
    %1228 = vmatprep.subr.bf16.mxu0 0
    %1229 = vmatpush1.bf16.msra.mxu0 0
    %1230 = vmatprep.subr.bf16.mxu0 0
    %1231 = vmatpush1.bf16.msra.mxu0 0
    %1232 = vmatprep.subr.bf16.mxu0 0
    %1233 = vmatpush1.bf16.msra.mxu0 0
    %1234 = vmatprep.subr.bf16.mxu0 0
    %1235 = vmatpush1.bf16.msra.mxu0 0
    %1236 = vmatprep.subr.bf16.mxu0 0
    %1237 = vmatpush1.bf16.msra.mxu0 0
    %1238 = vmatprep.subr.bf16.mxu0 0
    %1239 = vmatpush1.bf16.msra.mxu0 0
    %1240 = vmatprep.subr.bf16.mxu0 0
    %1241 = vmatpush1.bf16.msra.mxu0 0
    %1242 = vmatprep.subr.bf16.mxu0 0
    %1243 = vmatpush1.bf16.msra.mxu0 0
    %1244 = vmatprep.mubr.bf16.mxu0 0
    %1245 = vmatmul.mubr.bf16.gmra.mrb[0].mxu0 %v1140
    %v1246 = vpop.f32.mrb[0].mxu0
    %v1247 = vadd.f32 %v1162, %v1246
    %v1248 = vpop.f32.mrb[0].mxu0
    %v1249 = vpop.f32.mrb[0].mxu0
    %v1250 = vpop.f32.mrb[0].mxu0
    %1251 = vdwg.mxu0
    %1252 = vmax.xlane.f32.xlu0 %v1247
    %v1253 = vpop.xlane.xlu0 %1252
    %v1254 = vsub.f32 %v1247, %v1253
    %v1255 = vmul.f32 %v1254, 1.442695
    %v1256 = vpow.pop %v1255
    %1257 = vadd.xlane.f32.xlu0 %v1256
    %v1258 = vpop.xlane.xlu0 %1257
    %v1259 = vlog2.pop %v1258
    %v1260 = vmul.f32 %v1259, 0.6931472
    %v1261 = vadd.f32 %v1260, %v1253
    %v1262 = vsub.f32 %v1247, %v1261
    %1263 = vst [vmem:[%s9] sm:$0xff] %v1262
    // Predicated region
    $region50: #{_decode_impl.1} parent=1 // pred_check
      _
    $region51: #{_decode_impl.1} parent=1 // pred_check_branch
      %1265 = sbr.rel (0) target = $region53
    $region52: #{_decode_impl.1} parent=1 // pred_region
      _
    $region53: #{_decode_impl.1} parent=1 // pred_fallthru
      _
    // Predicated region
    $region54: #{_decode_impl.1} parent=1 // pred_check
      _
    $region55: #{_decode_impl.1} parent=1 // pred_check_branch
      %1267 = sbr.rel (0) target = $region57
    $region56: #{_decode_impl.1} parent=1 // pred_region
      _
    $region57: #{_decode_impl.1} parent=1 // pred_fallthru
      _
    // Predicated region
    $region58: #{_decode_impl.1} parent=1 // pred_check
      _
    $region59: #{_decode_impl.1} parent=1 // pred_check_branch
      %1269 = sbr.rel (0) target = $region61
    $region60: #{_decode_impl.1} parent=1 // pred_region
      _
    $region61: #{_decode_impl.1} parent=1 // pred_fallthru
      _
    // Predicated region
    $region62: #{_decode_impl.1} parent=1 // pred_check
      _
    $region63: #{_decode_impl.1} parent=1 // pred_check_branch
      %1271 = sbr.rel (0) target = $region65
    $region64: #{_decode_impl.1} parent=1 // pred_region
      _
    $region65: #{_decode_impl.1} parent=1 // pred_fallthru
      _
    // Predicated region
    $region66: #{_decode_impl.1} parent=1 // pred_check
      _
    $region67: #{_decode_impl.1} parent=1 // pred_check_branch
      %1273 = sbr.rel (0) target = $region69
    $region68: #{_decode_impl.1} parent=1 // pred_region
      _
    $region69: #{_decode_impl.1} parent=1 // pred_fallthru
      _
    // Predicated region
    $region70: #{_decode_impl.1} parent=1 // pred_check
      _
    $region71: #{_decode_impl.1} parent=1 // pred_check_branch
      %1275 = sbr.rel (0) target = $region73
    $region72: #{_decode_impl.1} parent=1 // pred_region
      _
    $region73: #{_decode_impl.1} parent=1 // pred_fallthru
      _
    %1276 = vsyncpa [#allocation3], 1
    %1277 = vsyncpa [#allocation5], 1

</llo_original>
